<compile_context>
chip_gen: v6e
topology: v6e:2x2x1
jax: 0.10.0
libtpu: 0.0.40
codegen_flags: <defaults>
</compile_context>

<pallas_src>
import jax
import jax.numpy as jnp
from jax.experimental import pallas as pl
from jax.experimental.pallas import tpu as pltpu

LANE = 128


def mlp_kernel(x_ref, w1_ref, b1_ref, w2_ref, b2_ref, w3_ref, b3_ref, o_ref):
    # Fused fc1 -> ReLU -> fc2 -> ReLU -> fc3 on one (TB, D) batch tile.
    # Weights arrive pre-padded/pre-cast to the MXU compute dtype (bf16);
    # biases are f32 and the bias/ReLU math happens in f32 vregs.
    cdt = w1_ref.dtype

    # Mirrors the PyTorch `x = x.to(self.fc1.weight.dtype)` cast, done on the
    # VMEM tile so x is DMA'd from HBM exactly once in its original dtype.
    x = x_ref[...].astype(cdt)

    h1 = jnp.dot(x, w1_ref[...], preferred_element_type=jnp.float32) + b1_ref[...]
    h1 = jnp.maximum(h1, 0.0)

    h2 = jnp.dot(h1.astype(cdt), w2_ref[...],
                 preferred_element_type=jnp.float32) + b2_ref[...]
    h2 = jnp.maximum(h2, 0.0)

    out = jnp.dot(h2.astype(cdt), w3_ref[...],
                  preferred_element_type=jnp.float32) + b3_ref[...]
    o_ref[...] = out.astype(o_ref.dtype)


def _round_up(n, m):
    return pl.cdiv(n, m) * m


def _pad2d(a, rows, cols):
    if a.shape == (rows, cols):
        return a
    return jnp.pad(a, ((0, rows - a.shape[0]), (0, cols - a.shape[1])))


def prepare_params(params, *, compute_dtype=jnp.bfloat16):
    """One-time weight prep: zero-pad feature dims to lane multiples of 128 and
    cast weights to the MXU compute dtype.  Zero padding is exact: padded w
    rows/cols are 0 and ReLU(0)=0, so padded lanes contribute nothing.
    """
    d_in, h1 = params["w1"].shape
    h2 = params["w2"].shape[1]
    nc = params["w3"].shape[1]

    d_in_p = _round_up(d_in, LANE)
    h1_p = _round_up(h1, LANE)
    h2_p = _round_up(h2, LANE)
    nc_p = _round_up(nc, LANE)

    return {
        "w1": _pad2d(params["w1"].astype(compute_dtype), d_in_p, h1_p),
        "w2": _pad2d(params["w2"].astype(compute_dtype), h1_p, h2_p),
        "w3": _pad2d(params["w3"].astype(compute_dtype), h2_p, nc_p),
        "b1": _pad2d(params["b1"].astype(jnp.float32).reshape(1, -1), 1, h1_p),
        "b2": _pad2d(params["b2"].astype(jnp.float32).reshape(1, -1), 1, h2_p),
        "b3": _pad2d(params["b3"].astype(jnp.float32).reshape(1, -1), 1, nc_p),
        "dims": (d_in, h1, h2, nc),
        "compute_dtype": compute_dtype,
    }


def _choose_tb(B, tb):
    if tb is not None:
        return min(_round_up(tb, 16), _round_up(B, 16))
    # >=2 grid steps so both v7x TensorCores get tiles under
    # dimension_semantics=("parallel",); tiles capped at 1024 rows so
    # single-TC v5e/v6e still cover the batch in a few fat steps.
    target_steps = max(2, pl.cdiv(B, 1024))
    return max(_round_up(pl.cdiv(B, target_steps), 16), 16)


def mlp_forward(x, prepared, *, tb=None, slice_output=True):
    """x: (B, D) float (f32 or bf16). prepared: output of prepare_params()."""
    B, d_in = x.shape
    d_in_ref, _, _, num_classes = prepared["dims"]
    assert d_in == d_in_ref, (d_in, d_in_ref)
    compute_dtype = prepared["compute_dtype"]

    w1, w2, w3 = prepared["w1"], prepared["w2"], prepared["w3"]
    b1, b2, b3 = prepared["b1"], prepared["b2"], prepared["b3"]
    d_in_p, h1_p = w1.shape
    h2_p = w2.shape[1]
    nc_p = w3.shape[1]

    TB = _choose_tb(B, tb)
    B_p = _round_up(B, TB)
    grid = (B_p // TB,)

    # Pad x only when actually misaligned; otherwise it is DMA'd straight from
    # its producer's buffer (no extra XLA pass).
    if (B_p, d_in_p) != (B, d_in):
        x = jnp.pad(x, ((0, B_p - B), (0, d_in_p - d_in)))

    # VMEM budget: double-buffered x/out tiles + (conservatively double-
    # buffered) resident weights + f32 intermediates + headroom.
    c_bytes = jnp.dtype(compute_dtype).itemsize
    x_bytes = jnp.dtype(x.dtype).itemsize
    w_bytes = (d_in_p * h1_p + h1_p * h2_p + h2_p * nc_p) * c_bytes \
              + (h1_p + h2_p + nc_p) * 4
    x_tile = TB * d_in_p * x_bytes
    out_tile = TB * nc_p * c_bytes
    interm = TB * (h1_p + h2_p + nc_p) * 4
    vmem_limit = int(2 * (x_tile + out_tile) + 2 * w_bytes + 2 * interm + (8 << 20))

    def resident(a):
        return pl.BlockSpec(a.shape, lambda i: (0,) * a.ndim)

    out_p = pl.pallas_call(
        mlp_kernel,
        out_shape=jax.ShapeDtypeStruct((B_p, nc_p), compute_dtype),
        grid=grid,
        in_specs=[
            pl.BlockSpec((TB, d_in_p), lambda i: (i, 0)),   # streamed x tiles
            resident(w1), resident(b1),
            resident(w2), resident(b2),
            resident(w3), resident(b3),
        ],
        out_specs=pl.BlockSpec((TB, nc_p), lambda i: (i, 0)),  # lane-dense store
        compiler_params=pltpu.CompilerParams(
            dimension_semantics=("parallel",),
            vmem_limit_bytes=vmem_limit,
        ),
    )(x, w1, b1, w2, b2, w3, b3)

    if slice_output and (B_p != B or nc_p != num_classes):
        return out_p[:B, :num_classes]
    return out_p


def init_params(key, input_size, num_classes):
    """Synthetic init mirroring MLP.__init__ shapes.

    PyTorch Linear stores weight as (out, in); we store the transpose (in, out)
    so the kernel computes x @ W + b directly.
    """
    h1 = input_size // 2
    h2 = input_size // 4
    k = jax.random.split(key, 6)

    def uni(k_, shape, fan_in):
        bound = 1.0 / jnp.sqrt(fan_in)
        return jax.random.uniform(k_, shape, jnp.float32, -bound, bound)

    return {
        "w1": uni(k[0], (input_size, h1), input_size),
        "b1": uni(k[1], (1, h1), input_size),
        "w2": uni(k[2], (h1, h2), h1),
        "b2": uni(k[3], (1, h2), h1),
        "w3": uni(k[4], (h2, num_classes), h2),
        "b3": uni(k[5], (1, num_classes), h2),
    }


def mlp_reference(x, params, compute_dtype=jnp.bfloat16):
    """Reference with numerics matching the kernel (bf16 MXU feed, f32 acc)."""
    def mm(a, w):
        return jnp.dot(a.astype(compute_dtype), w.astype(compute_dtype),
                       preferred_element_type=jnp.float32)
    h1 = jnp.maximum(mm(x, params["w1"]) + params["b1"], 0.0)
    h2 = jnp.maximum(mm(h1, params["w2"]) + params["b2"], 0.0)
    return mm(h2, params["w3"]) + params["b3"]


if __name__ == "__main__":
    input_size = 256
    num_classes = 10
    batch = 512   # small overall, but big enough to exercise the batch grid

    key = jax.random.PRNGKey(0)
    kx, kp = jax.random.split(key)
    x = jax.random.normal(kx, (batch, input_size), jnp.float32)
    params = init_params(kp, input_size, num_classes)

    # One-time weight prep (hoisted out of the per-call forward path).
    prepared = prepare_params(params, compute_dtype=jnp.bfloat16)

    out = mlp_forward(x, prepared)
    out = jax.block_until_ready(out)

    ref = mlp_reference(x, params, compute_dtype=jnp.bfloat16)
    assert out.shape == (batch, num_classes)
    assert out.dtype == jnp.bfloat16

    out_f32 = out.astype(jnp.float32)
    max_err = float(jnp.max(jnp.abs(out_f32 - ref)))
    assert jnp.allclose(out_f32, ref, atol=5e-2, rtol=2e-2), max_err

    print("KERNEL_OK")
</pallas_src>

<mosaic_0001>
module attributes {stable_mosaic.version = 11 : i64} {
  func.func @mlp_kernel(%arg0: i32, %arg1: memref<256x256xf32, #tpu.memory_space<vmem>>, %arg2: memref<256x128xbf16, #tpu.memory_space<vmem>>, %arg3: memref<1x128xf32, #tpu.memory_space<vmem>>, %arg4: memref<128x128xbf16, #tpu.memory_space<vmem>>, %arg5: memref<1x128xf32, #tpu.memory_space<vmem>>, %arg6: memref<128x128xbf16, #tpu.memory_space<vmem>>, %arg7: memref<1x128xf32, #tpu.memory_space<vmem>>, %arg8: memref<256x128xbf16, #tpu.memory_space<vmem>>) attributes {dimension_semantics = [#tpu.dimension_semantics<parallel>], iteration_bounds = array<i64: 2>, scalar_prefetch = 0 : i64, scratch_operands = 0 : i64, tpu.core_type = #tpu.core_type<tc>, window_params = [{transform_indices = @transform_0, window_bounds = array<i64: 256, 256>}, {pipeline_mode = #tpu.pipeline_mode<synchronous>, transform_indices = @transform_1, window_bounds = array<i64: 256, 128>}, {pipeline_mode = #tpu.pipeline_mode<synchronous>, transform_indices = @transform_2, window_bounds = array<i64: 1, 128>}, {pipeline_mode = #tpu.pipeline_mode<synchronous>, transform_indices = @transform_3, window_bounds = array<i64: 128, 128>}, {pipeline_mode = #tpu.pipeline_mode<synchronous>, transform_indices = @transform_4, window_bounds = array<i64: 1, 128>}, {pipeline_mode = #tpu.pipeline_mode<synchronous>, transform_indices = @transform_5, window_bounds = array<i64: 128, 128>}, {pipeline_mode = #tpu.pipeline_mode<synchronous>, transform_indices = @transform_6, window_bounds = array<i64: 1, 128>}, {transform_indices = @transform_7, window_bounds = array<i64: 256, 128>}]} {
    %c0 = arith.constant 0 : index
    %c0_0 = arith.constant 0 : index
    %0 = vector.load %arg1[%c0, %c0_0] : memref<256x256xf32, #tpu.memory_space<vmem>>, vector<256x256xf32>
    %1 = arith.truncf %0 : vector<256x256xf32> to vector<256x256xbf16>
    %c0_1 = arith.constant 0 : index
    %c0_2 = arith.constant 0 : index
    %2 = vector.load %arg2[%c0_1, %c0_2] : memref<256x128xbf16, #tpu.memory_space<vmem>>, vector<256x128xbf16>
    %cst = arith.constant dense<0.000000e+00> : vector<256x128xf32>
    %3 = tpu.matmul %1, %2, %cst {dimension_numbers = #tpu.dot_dimension_numbers<[1], [0], [0], [1], [0, 0, 1, 1], [], []>} : vector<256x256xbf16>, vector<256x128xbf16>, vector<256x128xf32> -> vector<256x128xf32>
    %c0_3 = arith.constant 0 : index
    %c0_4 = arith.constant 0 : index
    %4 = vector.load %arg3[%c0_3, %c0_4] : memref<1x128xf32, #tpu.memory_space<vmem>>, vector<1x128xf32>
    %5 = vector.broadcast %4 : vector<1x128xf32> to vector<256x128xf32>
    %6 = arith.addf %3, %5 : vector<256x128xf32>
    %cst_5 = arith.constant 0.000000e+00 : f32
    %7 = vector.broadcast %cst_5 : f32 to vector<256x128xf32>
    %8 = arith.maximumf %6, %7 : vector<256x128xf32>
    %9 = arith.truncf %8 : vector<256x128xf32> to vector<256x128xbf16>
    %c0_6 = arith.constant 0 : index
    %c0_7 = arith.constant 0 : index
    %10 = vector.load %arg4[%c0_6, %c0_7] : memref<128x128xbf16, #tpu.memory_space<vmem>>, vector<128x128xbf16>
    %cst_8 = arith.constant dense<0.000000e+00> : vector<256x128xf32>
    %11 = tpu.matmul %9, %10, %cst_8 {dimension_numbers = #tpu.dot_dimension_numbers<[1], [0], [0], [1], [0, 0, 1, 1], [], []>} : vector<256x128xbf16>, vector<128x128xbf16>, vector<256x128xf32> -> vector<256x128xf32>
    %c0_9 = arith.constant 0 : index
    %c0_10 = arith.constant 0 : index
    %12 = vector.load %arg5[%c0_9, %c0_10] : memref<1x128xf32, #tpu.memory_space<vmem>>, vector<1x128xf32>
    %13 = vector.broadcast %12 : vector<1x128xf32> to vector<256x128xf32>
    %14 = arith.addf %11, %13 : vector<256x128xf32>
    %cst_11 = arith.constant 0.000000e+00 : f32
    %15 = vector.broadcast %cst_11 : f32 to vector<256x128xf32>
    %16 = arith.maximumf %14, %15 : vector<256x128xf32>
    %17 = arith.truncf %16 : vector<256x128xf32> to vector<256x128xbf16>
    %c0_12 = arith.constant 0 : index
    %c0_13 = arith.constant 0 : index
    %18 = vector.load %arg6[%c0_12, %c0_13] : memref<128x128xbf16, #tpu.memory_space<vmem>>, vector<128x128xbf16>
    %cst_14 = arith.constant dense<0.000000e+00> : vector<256x128xf32>
    %19 = tpu.matmul %17, %18, %cst_14 {dimension_numbers = #tpu.dot_dimension_numbers<[1], [0], [0], [1], [0, 0, 1, 1], [], []>} : vector<256x128xbf16>, vector<128x128xbf16>, vector<256x128xf32> -> vector<256x128xf32>
    %c0_15 = arith.constant 0 : index
    %c0_16 = arith.constant 0 : index
    %20 = vector.load %arg7[%c0_15, %c0_16] : memref<1x128xf32, #tpu.memory_space<vmem>>, vector<1x128xf32>
    %21 = vector.broadcast %20 : vector<1x128xf32> to vector<256x128xf32>
    %22 = arith.addf %19, %21 : vector<256x128xf32>
    %23 = arith.truncf %22 : vector<256x128xf32> to vector<256x128xbf16>
    %c0_17 = arith.constant 0 : index
    %c0_18 = arith.constant 0 : index
    %24 = vector.load %arg8[%c0_17, %c0_18] : memref<256x128xbf16, #tpu.memory_space<vmem>>, vector<256x128xbf16>
    tpu.vector_store %arg8[%c0_17, %c0_18], %23 {strides = array<i32>} : memref<256x128xbf16, #tpu.memory_space<vmem>>, vector<256x128xbf16>,
    return
  }
  func.func @transform_0(%arg0: i32) -> (i32, i32) {
    %c0_i32 = arith.constant 0 : i32
    %c0_i32_0 = arith.constant 0 : i32
    return %arg0, %c0_i32 : i32, i32
  }
  func.func @transform_1(%arg0: i32) -> (i32, i32) {
    %c0_i32 = arith.constant 0 : i32
    %c0_i32_0 = arith.constant 0 : i32
    %c0_i32_1 = arith.constant 0 : i32
    return %c0_i32, %c0_i32_0 : i32, i32
  }
  func.func @transform_2(%arg0: i32) -> (i32, i32) {
    %c0_i32 = arith.constant 0 : i32
    %c0_i32_0 = arith.constant 0 : i32
    %c0_i32_1 = arith.constant 0 : i32
    return %c0_i32, %c0_i32_0 : i32, i32
  }
  func.func @transform_3(%arg0: i32) -> (i32, i32) {
    %c0_i32 = arith.constant 0 : i32
    %c0_i32_0 = arith.constant 0 : i32
    %c0_i32_1 = arith.constant 0 : i32
    return %c0_i32, %c0_i32_0 : i32, i32
  }
  func.func @transform_4(%arg0: i32) -> (i32, i32) {
    %c0_i32 = arith.constant 0 : i32
    %c0_i32_0 = arith.constant 0 : i32
    %c0_i32_1 = arith.constant 0 : i32
    return %c0_i32, %c0_i32_0 : i32, i32
  }
  func.func @transform_5(%arg0: i32) -> (i32, i32) {
    %c0_i32 = arith.constant 0 : i32
    %c0_i32_0 = arith.constant 0 : i32
    %c0_i32_1 = arith.constant 0 : i32
    return %c0_i32, %c0_i32_0 : i32, i32
  }
  func.func @transform_6(%arg0: i32) -> (i32, i32) {
    %c0_i32 = arith.constant 0 : i32
    %c0_i32_0 = arith.constant 0 : i32
    %c0_i32_1 = arith.constant 0 : i32
    return %c0_i32, %c0_i32_0 : i32, i32
  }
  func.func @transform_7(%arg0: i32) -> (i32, i32) {
    %c0_i32 = arith.constant 0 : i32
    %c0_i32_0 = arith.constant 0 : i32
    return %arg0, %c0_i32 : i32, i32
  }
}

</mosaic_0001>

<llo_original>
// kernel: tpu_custom_call.1
$region0: #{tpu_custom_call.1}
  #allocation0 [shape = 'u32[]', space=smem, size = 0x4, offset = 0x4, fixed_abs, tag = 'smem constant byte address 0x4 - core index']
  #allocation1 [shape = 'u32[144,128]{1,0:T(1,128)}', space=vmem, size = 0x12000, scoped, tag = 'internal scratch']
  %s0 = inlined_call_operand.hbm [shape: f32[512,256], index: 0, kind: input, shape index: {}]
  %s1 = inlined_call_operand.hbm [shape: bf16[256,128], index: 1, kind: input, shape index: {}]
  %s2 = inlined_call_operand.vmem [shape: f32[1,128], index: 2, kind: input, shape index: {}]
  %s3 = inlined_call_operand.hbm [shape: bf16[128,128], index: 3, kind: input, shape index: {}]
  %s4 = inlined_call_operand.vmem [shape: f32[1,128], index: 4, kind: input, shape index: {}]
  %s5 = inlined_call_operand.hbm [shape: bf16[128,128], index: 5, kind: input, shape index: {}]
  %s6 = inlined_call_operand.vmem [shape: f32[1,128], index: 6, kind: input, shape index: {}]
  %s7 = inlined_call_operand.hbm [shape: bf16[512,128], index: 7, kind: output, shape index: {}]
  %s8 = sld [smem:[#allocation0]]
  $region77: #{tpu_custom_call.1} parent=0
    _
  %s10 = ssub.s32 1, %s8
  %s11 = scalar_select 0, %s10, %s8
  $region1: #{tpu_custom_call.1} parent=0
    #allocation2 [shape = 'u8[524288]{0}', space=vmem, size = 0x80000, scoped, tag = 'input window, operand 0']
    #allocation3 [shape = 's32[2]{0}', space=sflag, size = 0x8, scoped, tag = 'scoped memory for tpu_custom_call.1']
    #allocation4 [shape = 's32[2]{0}', space=sflag, size = 0x8, scoped, tag = 'scoped memory for tpu_custom_call.1']
    #allocation5 [shape = 'u8[65536]{0}', space=vmem, size = 0x10000, scoped, tag = 'input window, operand 1, single buffered']
    #allocation6 [shape = 's32[1]{0}', space=sflag, size = 0x4, scoped, tag = 'scoped memory for tpu_custom_call.1']
    #allocation7 [shape = 'u8[32768]{0}', space=vmem, size = 0x8000, scoped, tag = 'input window, operand 3, single buffered']
    #allocation8 [shape = 'u8[32768]{0}', space=vmem, size = 0x8000, scoped, tag = 'input window, operand 5, single buffered']
    #allocation9 [shape = 's32[1]{0}', space=sflag, size = 0x4, scoped, tag = 'scoped memory for tpu_custom_call.1']
    #allocation10 [shape = 'u8[131072]{0}', space=vmem, size = 0x20000, scoped, tag = 'output window, operand 0']
    %12 = vsyncpa [#allocation3], 0
    %s13 = scalar_lea.sflag [#allocation3], 1
    %14 = vsyncpa %s13, 0
    %15 = vsyncpa [#allocation6], 0
    %16 = vsyncpa [#allocation9], 0
    %17 = vsyncpa [#allocation4], 0
    %s18 = scalar_lea.sflag [#allocation4], 1
    %19 = vsyncpa %s18, 0
    loop: start=0, step=1, limit=4
    $region2: #{tpu_custom_call.1} parent=1 // loop_pre_header
      _
    $region3: #{tpu_custom_call.1} parent=1 // loop_header
      %s21 = sphi 0, %s25
      %p22 = scmp.ge.s32.totalorder %s21, 4
      %s31 = sphi 0, %s33
      %s34 = sphi 0, %s31
      %s35 = sphi 0, %s34
      %s51 = sphi 0, %s35
      %s55 = sphi 0, %s55
      %s57 = sphi 0, %s55
      %s58 = sphi 0, %s57
      %s72 = sphi 0, %s58
      %s76 = sphi 0, %s76
      %s78 = sphi 0, %s76
      %s79 = sphi 0, %s78
      %s93 = sphi 0, %s79
      %s97 = sphi 0, %s97
      %s99 = sphi 0, %s97
      %s100 = sphi 0, %s99
      %s114 = sphi 0, %s100
      %s118 = sphi 0, %s118
      %s120 = sphi 0, %s118
      %s121 = sphi 0, %s120
      %s135 = sphi 0, %s121
      %s139 = sphi 0, %s139
      %s141 = sphi 0, %s139
      %s142 = sphi 0, %s141
      %s156 = sphi 0, %s142
      %s160 = sphi 0, %s160
      %s162 = sphi 0, %s160
      %s163 = sphi 0, %s162
      %s177 = sphi 0, %s163
      %s183 = sphi 0, %s185
      %s186 = sphi 0, %s183
      %s187 = sphi 0, %s186
      %s203 = sphi 0, %s187
    $region4: #{tpu_custom_call.1} parent=1 // loop_header_branch
      %24 = sbr.rel (%p22) target = $region8
    $region5: #{tpu_custom_call.1} parent=1 // loop_body
      %s26 = ssub.s32 %s21, 1
      %s27 = ssub.s32 %s21, 2
      %s28 = sadd.s32 %s21, 1
      %s29 = ssub.s32 %s21, %s28
      %p30 = scmp.eq.s32.totalorder %s29, 0
      %s32 = sadd.s32 %s31, 1
      %s33 = scalar_select %p30, %s31, %s32
      %p36 = pneg %p30
      %p37 = scmp.eq.s32.totalorder %s21, 1
      %p38 = por %p36, %p37
      %p39 = scmp.ne.s32.totalorder %s31, %s34
      %p40 = scmp.eq.s32.totalorder %s21, 0
      %p41 = por %p39, %p40
      %p42 = scmp.ne.s32.totalorder %s31, %s34
      %p43 = scmp.eq.s32.totalorder %s26, 1
      %p44 = por %p42, %p43
      %p45 = scmp.ne.s32.totalorder %s34, %s35
      %p46 = scmp.eq.s32.totalorder %s26, 0
      %p47 = por %p45, %p46
      %p48 = scmp.ne.s32.totalorder %s34, %s35
      %p49 = scmp.eq.s32.totalorder %s27, 1
      %p50 = por %p48, %p49
      %p52 = scmp.ne.s32.totalorder %s35, %s51
      %p53 = scmp.eq.s32.totalorder %s27, 0
      %p54 = por %p52, %p53
      %s56 = sadd.s32 %s55, 1
      %p59 = scmp.eq.s32.totalorder %s21, 1
      %p60 = scmp.ne.s32.totalorder %s55, %s57
      %p61 = scmp.eq.s32.totalorder %s21, 0
      %p62 = por %p60, %p61
      %p63 = scmp.ne.s32.totalorder %s55, %s57
      %p64 = scmp.eq.s32.totalorder %s26, 1
      %p65 = por %p63, %p64
      %p66 = scmp.ne.s32.totalorder %s57, %s58
      %p67 = scmp.eq.s32.totalorder %s26, 0
      %p68 = por %p66, %p67
      %p69 = scmp.ne.s32.totalorder %s57, %s58
      %p70 = scmp.eq.s32.totalorder %s27, 1
      %p71 = por %p69, %p70
      %p73 = scmp.ne.s32.totalorder %s58, %s72
      %p74 = scmp.eq.s32.totalorder %s27, 0
      %p75 = por %p73, %p74
      %s77 = sadd.s32 %s76, 1
      %p80 = scmp.eq.s32.totalorder %s21, 1
      %p81 = scmp.ne.s32.totalorder %s76, %s78
      %p82 = scmp.eq.s32.totalorder %s21, 0
      %p83 = por %p81, %p82
      %p84 = scmp.ne.s32.totalorder %s76, %s78
      %p85 = scmp.eq.s32.totalorder %s26, 1
      %p86 = por %p84, %p85
      %p87 = scmp.ne.s32.totalorder %s78, %s79
      %p88 = scmp.eq.s32.totalorder %s26, 0
      %p89 = por %p87, %p88
      %p90 = scmp.ne.s32.totalorder %s78, %s79
      %p91 = scmp.eq.s32.totalorder %s27, 1
      %p92 = por %p90, %p91
      %p94 = scmp.ne.s32.totalorder %s79, %s93
      %p95 = scmp.eq.s32.totalorder %s27, 0
      %p96 = por %p94, %p95
      %s98 = sadd.s32 %s97, 1
      %p101 = scmp.eq.s32.totalorder %s21, 1
      %p102 = scmp.ne.s32.totalorder %s97, %s99
      %p103 = scmp.eq.s32.totalorder %s21, 0
      %p104 = por %p102, %p103
      %p105 = scmp.ne.s32.totalorder %s97, %s99
      %p106 = scmp.eq.s32.totalorder %s26, 1
      %p107 = por %p105, %p106
      %p108 = scmp.ne.s32.totalorder %s99, %s100
      %p109 = scmp.eq.s32.totalorder %s26, 0
      %p110 = por %p108, %p109
      %p111 = scmp.ne.s32.totalorder %s99, %s100
      %p112 = scmp.eq.s32.totalorder %s27, 1
      %p113 = por %p111, %p112
      %p115 = scmp.ne.s32.totalorder %s100, %s114
      %p116 = scmp.eq.s32.totalorder %s27, 0
      %p117 = por %p115, %p116
      %s119 = sadd.s32 %s118, 1
      %p122 = scmp.eq.s32.totalorder %s21, 1
      %p123 = scmp.ne.s32.totalorder %s118, %s120
      %p124 = scmp.eq.s32.totalorder %s21, 0
      %p125 = por %p123, %p124
      %p126 = scmp.ne.s32.totalorder %s118, %s120
      %p127 = scmp.eq.s32.totalorder %s26, 1
      %p128 = por %p126, %p127
      %p129 = scmp.ne.s32.totalorder %s120, %s121
      %p130 = scmp.eq.s32.totalorder %s26, 0
      %p131 = por %p129, %p130
      %p132 = scmp.ne.s32.totalorder %s120, %s121
      %p133 = scmp.eq.s32.totalorder %s27, 1
      %p134 = por %p132, %p133
      %p136 = scmp.ne.s32.totalorder %s121, %s135
      %p137 = scmp.eq.s32.totalorder %s27, 0
      %p138 = por %p136, %p137
      %s140 = sadd.s32 %s139, 1
      %p143 = scmp.eq.s32.totalorder %s21, 1
      %p144 = scmp.ne.s32.totalorder %s139, %s141
      %p145 = scmp.eq.s32.totalorder %s21, 0
      %p146 = por %p144, %p145
      %p147 = scmp.ne.s32.totalorder %s139, %s141
      %p148 = scmp.eq.s32.totalorder %s26, 1
      %p149 = por %p147, %p148
      %p150 = scmp.ne.s32.totalorder %s141, %s142
      %p151 = scmp.eq.s32.totalorder %s26, 0
      %p152 = por %p150, %p151
      %p153 = scmp.ne.s32.totalorder %s141, %s142
      %p154 = scmp.eq.s32.totalorder %s27, 1
      %p155 = por %p153, %p154
      %p157 = scmp.ne.s32.totalorder %s142, %s156
      %p158 = scmp.eq.s32.totalorder %s27, 0
      %p159 = por %p157, %p158
      %s161 = sadd.s32 %s160, 1
      %p164 = scmp.eq.s32.totalorder %s21, 1
      %p165 = scmp.ne.s32.totalorder %s160, %s162
      %p166 = scmp.eq.s32.totalorder %s21, 0
      %p167 = por %p165, %p166
      %p168 = scmp.ne.s32.totalorder %s160, %s162
      %p169 = scmp.eq.s32.totalorder %s26, 1
      %p170 = por %p168, %p169
      %p171 = scmp.ne.s32.totalorder %s162, %s163
      %p172 = scmp.eq.s32.totalorder %s26, 0
      %p173 = por %p171, %p172
      %p174 = scmp.ne.s32.totalorder %s162, %s163
      %p175 = scmp.eq.s32.totalorder %s27, 1
      %p176 = por %p174, %p175
      %p178 = scmp.ne.s32.totalorder %s163, %s177
      %p179 = scmp.eq.s32.totalorder %s27, 0
      %p180 = por %p178, %p179
      %s181 = ssub.s32 %s21, %s28
      %p182 = scmp.eq.s32.totalorder %s181, 0
      %s184 = sadd.s32 %s183, 1
      %s185 = scalar_select %p182, %s183, %s184
      %p188 = pneg %p182
      %p189 = scmp.eq.s32.totalorder %s21, 1
      %p190 = por %p188, %p189
      %p191 = scmp.ne.s32.totalorder %s183, %s186
      %p192 = scmp.eq.s32.totalorder %s21, 0
      %p193 = por %p191, %p192
      %p194 = scmp.ne.s32.totalorder %s183, %s186
      %p195 = scmp.eq.s32.totalorder %s26, 1
      %p196 = por %p194, %p195
      %p197 = scmp.ne.s32.totalorder %s186, %s187
      %p198 = scmp.eq.s32.totalorder %s26, 0
      %p199 = por %p197, %p198
      %p200 = scmp.ne.s32.totalorder %s186, %s187
      %p201 = scmp.eq.s32.totalorder %s27, 1
      %p202 = por %p200, %p201
      %p204 = scmp.ne.s32.totalorder %s187, %s203
      %p205 = scmp.eq.s32.totalorder %s27, 0
      %p206 = por %p204, %p205
      %p207 = scmp.le.s32.totalorder 1, %s21
      %p208 = scmp.lt.s32.totalorder %s21, 3
      %p209 = pnand %p207, %p208
      %p210 = pneg %p209
      // Predicated region
      $region9: #{tpu_custom_call.1} parent=5 // pred_check
        _
      $region10: #{tpu_custom_call.1} parent=5 // pred_check_branch
        %212 = sbr.rel (%p209) target = $region12
      $region11: #{tpu_custom_call.1} parent=5 // pred_region
        %s213 = ssub.s32 %s21, 1
        // Predicated region
        $region13: #{tpu_custom_call.1} parent=11 // pred_check
          %p214 = pneg %p68
        $region14: #{tpu_custom_call.1} parent=11 // pred_check_branch
          %216 = sbr.rel (%p214) target = $region16
        $region15: #{tpu_custom_call.1} parent=11 // pred_region
          %s218 = ssub.s32 2048, 2048
          %219 = vsyncadd [#allocation6], %s218
          %s220 = sshll.u32 [#allocation5], 4
          %s221 = int_to_ptr.vmem [resolvable:$true] %s220
          %226 = dma.hbm_to_vmem [thread:$0]  %s1, 2048, %s221, [#allocation6], 64, 64, 4
        $region16: #{tpu_custom_call.1} parent=11 // pred_fallthru
          _
        // Predicated region
        $region17: #{tpu_custom_call.1} parent=11 // pred_check
          %p227 = pneg %p89
        $region18: #{tpu_custom_call.1} parent=11 // pred_check_branch
          %229 = sbr.rel (%p227) target = $region20
        $region19: #{tpu_custom_call.1} parent=11 // pred_region
          _
        $region20: #{tpu_custom_call.1} parent=11 // pred_fallthru
          _
        // Predicated region
        $region21: #{tpu_custom_call.1} parent=11 // pred_check
          %p230 = pneg %p110
        $region22: #{tpu_custom_call.1} parent=11 // pred_check_branch
          %232 = sbr.rel (%p230) target = $region24
        $region23: #{tpu_custom_call.1} parent=11 // pred_region
          %s234 = ssub.s32 1024, 1024
          %235 = vsyncadd [#allocation6], %s234
          %s236 = sshll.u32 [#allocation7], 4
          %s237 = int_to_ptr.vmem [resolvable:$true] %s236
          %242 = dma.hbm_to_vmem [thread:$0]  %s3, 1024, %s237, [#allocation6], 64, 64, 4
        $region24: #{tpu_custom_call.1} parent=11 // pred_fallthru
          _
        // Predicated region
        $region25: #{tpu_custom_call.1} parent=11 // pred_check
          %p243 = pneg %p131
        $region26: #{tpu_custom_call.1} parent=11 // pred_check_branch
          %245 = sbr.rel (%p243) target = $region28
        $region27: #{tpu_custom_call.1} parent=11 // pred_region
          _
        $region28: #{tpu_custom_call.1} parent=11 // pred_fallthru
          _
        // Predicated region
        $region29: #{tpu_custom_call.1} parent=11 // pred_check
          %p246 = pneg %p152
        $region30: #{tpu_custom_call.1} parent=11 // pred_check_branch
          %248 = sbr.rel (%p246) target = $region32
        $region31: #{tpu_custom_call.1} parent=11 // pred_region
          %s250 = ssub.s32 1024, 1024
          %251 = vsyncadd [#allocation9], %s250
          %s252 = sshll.u32 [#allocation8], 4
          %s253 = int_to_ptr.vmem [resolvable:$true] %s252
          %258 = dma.hbm_to_vmem [thread:$0]  %s5, 1024, %s253, [#allocation9], 64, 64, 4
        $region32: #{tpu_custom_call.1} parent=11 // pred_fallthru
          _
        // Predicated region
        $region33: #{tpu_custom_call.1} parent=11 // pred_check
          %p259 = pneg %p173
        $region34: #{tpu_custom_call.1} parent=11 // pred_check_branch
          %261 = sbr.rel (%p259) target = $region36
        $region35: #{tpu_custom_call.1} parent=11 // pred_region
          _
        $region36: #{tpu_custom_call.1} parent=11 // pred_fallthru
          _
      $region12: #{tpu_custom_call.1} parent=5 // pred_fallthru
        _
      %p262 = scmp.lt.s32.totalorder %s21, 2
      // Predicated region
      $region37: #{tpu_custom_call.1} parent=5 // pred_check
        %p263 = pneg %p262
      $region38: #{tpu_custom_call.1} parent=5 // pred_check_branch
        %265 = sbr.rel (%p263) target = $region40
      $region39: #{tpu_custom_call.1} parent=5 // pred_region
        // Predicated region
        $region41: #{tpu_custom_call.1} parent=39 // pred_check
          %p266 = pneg %p41
        $region42: #{tpu_custom_call.1} parent=39 // pred_check_branch
          %268 = sbr.rel (%p266) target = $region44
        $region43: #{tpu_custom_call.1} parent=39 // pred_region
          %s269 = sand.u32 %s31, 1
          %s270 = scalar_lea.sflag [#allocation3], %s269
          %s271 = sand.u32 %s31, 1
          %s272 = smul.addr %s271, 512
          %s273 = scalar_lea.vmem [#allocation2], %s272
          %s274 = smul.u32 32, %s21
          %s276 = ssub.s32 8192, 8192
          %277 = vsyncadd %s270, %s276
          %s278 = smul.addr %s274, 2
          %s279 = smul.addr %s278, 128
          %s280 = scalar_lea.hbm %s0, %s279
          %s281 = sshll.u32 %s273, 4
          %s282 = int_to_ptr.vmem [resolvable:$true] %s281
          %287 = dma.hbm_to_vmem [thread:$0]  %s280, 8192, %s282, %s270, 256, 256, 16
        $region44: #{tpu_custom_call.1} parent=39 // pred_fallthru
          _
      $region40: #{tpu_custom_call.1} parent=5 // pred_fallthru
        _
      %p288 = scmp.le.s32.totalorder 1, %s21
      %p289 = scmp.lt.s32.totalorder %s21, 3
      %p290 = pnand %p288, %p289
      %p291 = pneg %p290
      // Predicated region
      $region45: #{tpu_custom_call.1} parent=5 // pred_check
        _
      $region46: #{tpu_custom_call.1} parent=5 // pred_check_branch
        %293 = sbr.rel (%p290) target = $region48
      $region47: #{tpu_custom_call.1} parent=5 // pred_region
        %s294 = ssub.s32 %s21, 1
        %s295 = sand.u32 %s34, 1
        %s296 = scalar_lea.sflag [#allocation3], %s295
        %s297 = sand.u32 %s34, 1
        %s298 = smul.addr %s297, 512
        %s299 = scalar_lea.vmem [#allocation2], %s298
        // Predicated region
        $region49: #{tpu_custom_call.1} parent=47 // pred_check
          %p300 = pneg %p47
        $region50: #{tpu_custom_call.1} parent=47 // pred_check_branch
          %302 = sbr.rel (%p300) target = $region52
        $region51: #{tpu_custom_call.1} parent=47 // pred_region
          %303 = dma.done %s296, 8192
        $region52: #{tpu_custom_call.1} parent=47 // pred_fallthru
          _
        // Predicated region
        $region53: #{tpu_custom_call.1} parent=47 // pred_check
          %p304 = pneg %p68
        $region54: #{tpu_custom_call.1} parent=47 // pred_check_branch
          %306 = sbr.rel (%p304) target = $region56
        $region55: #{tpu_custom_call.1} parent=47 // pred_region
          %307 = dma.done [#allocation6], 2048
        $region56: #{tpu_custom_call.1} parent=47 // pred_fallthru
          _
        // Predicated region
        $region57: #{tpu_custom_call.1} parent=47 // pred_check
          %p308 = pneg %p110
        $region58: #{tpu_custom_call.1} parent=47 // pred_check_branch
          %310 = sbr.rel (%p308) target = $region60
        $region59: #{tpu_custom_call.1} parent=47 // pred_region
          %311 = dma.done [#allocation6], 1024
        $region60: #{tpu_custom_call.1} parent=47 // pred_fallthru
          _
        // Predicated region
        $region61: #{tpu_custom_call.1} parent=47 // pred_check
          %p312 = pneg %p152
        $region62: #{tpu_custom_call.1} parent=47 // pred_check_branch
          %314 = sbr.rel (%p312) target = $region64
        $region63: #{tpu_custom_call.1} parent=47 // pred_region
          %315 = dma.done [#allocation9], 1024
        $region64: #{tpu_custom_call.1} parent=47 // pred_fallthru
          _
        %s316 = sand.u32 %s34, 1
        %s317 = scalar_lea.sflag [#allocation3], %s316
        %s318 = sand.u32 %s34, 1
        %s319 = smul.addr %s318, 512
        %s320 = scalar_lea.vmem [#allocation2], %s319
        %p321 = pneg %p47
        %p322 = pneg %p44
        %p323 = pneg %p68
        %p324 = pneg %p65
        %p325 = pneg %p89
        %p326 = pneg %p86
        %p327 = pneg %p110
        %p328 = pneg %p107
        %p329 = pneg %p131
        %p330 = pneg %p128
        %p331 = pneg %p152
        %p332 = pneg %p149
        %p333 = pneg %p173
        %p334 = pneg %p170
        %p335 = pneg %p199
        %p336 = pneg %p196
        %s337 = sand.u32 %s186, 1
        %s338 = scalar_lea.sflag [#allocation4], %s337
        %s339 = sand.u32 %s186, 1
        %s340 = smul.addr %s339, 128
        %s341 = scalar_lea.vmem [#allocation10], %s340
        %s342 = smul.u32 32, %s26
        %s343 = smul.u32 32, %s26
        %v345 = vld [vmem:[%s299] sm:$0xff]
        %v346 = vld [vmem:[%s299 + $0x8] sm:$0xff]
        %v347 = vld [vmem:[%s299 + $0x10] sm:$0xff]
        %v348 = vld [vmem:[%s299 + $0x18] sm:$0xff]
        %v349 = vld [vmem:[%s299 + $0x20] sm:$0xff]
        %v350 = vld [vmem:[%s299 + $0x28] sm:$0xff]
        %v351 = vld [vmem:[%s299 + $0x30] sm:$0xff]
        %v352 = vld [vmem:[%s299 + $0x38] sm:$0xff]
        %v353 = vld [vmem:[%s299 + $0x40] sm:$0xff]
        %v354 = vld [vmem:[%s299 + $0x48] sm:$0xff]
        %v355 = vld [vmem:[%s299 + $0x50] sm:$0xff]
        %v356 = vld [vmem:[%s299 + $0x58] sm:$0xff]
        %v357 = vld [vmem:[%s299 + $0x60] sm:$0xff]
        %v358 = vld [vmem:[%s299 + $0x68] sm:$0xff]
        %v359 = vld [vmem:[%s299 + $0x70] sm:$0xff]
        %v360 = vld [vmem:[%s299 + $0x78] sm:$0xff]
        %v361 = vld [vmem:[%s299 + $0x80] sm:$0xff]
        %v362 = vld [vmem:[%s299 + $0x88] sm:$0xff]
        %v363 = vld [vmem:[%s299 + $0x90] sm:$0xff]
        %v364 = vld [vmem:[%s299 + $0x98] sm:$0xff]
        %v365 = vld [vmem:[%s299 + $0xa0] sm:$0xff]
        %v366 = vld [vmem:[%s299 + $0xa8] sm:$0xff]
        %v367 = vld [vmem:[%s299 + $0xb0] sm:$0xff]
        %v368 = vld [vmem:[%s299 + $0xb8] sm:$0xff]
        %v369 = vld [vmem:[%s299 + $0xc0] sm:$0xff]
        %v370 = vld [vmem:[%s299 + $0xc8] sm:$0xff]
        %v371 = vld [vmem:[%s299 + $0xd0] sm:$0xff]
        %v372 = vld [vmem:[%s299 + $0xd8] sm:$0xff]
        %v373 = vld [vmem:[%s299 + $0xe0] sm:$0xff]
        %v374 = vld [vmem:[%s299 + $0xe8] sm:$0xff]
        %v375 = vld [vmem:[%s299 + $0xf0] sm:$0xff]
        %v376 = vld [vmem:[%s299 + $0xf8] sm:$0xff]
        %v377 = vld [vmem:[%s299 + $0x100] sm:$0xff]
        %v378 = vld [vmem:[%s299 + $0x108] sm:$0xff]
        %v379 = vld [vmem:[%s299 + $0x110] sm:$0xff]
        %v380 = vld [vmem:[%s299 + $0x118] sm:$0xff]
        %v381 = vld [vmem:[%s299 + $0x120] sm:$0xff]
        %v382 = vld [vmem:[%s299 + $0x128] sm:$0xff]
        %v383 = vld [vmem:[%s299 + $0x130] sm:$0xff]
        %v384 = vld [vmem:[%s299 + $0x138] sm:$0xff]
        %v385 = vld [vmem:[%s299 + $0x140] sm:$0xff]
        %v386 = vld [vmem:[%s299 + $0x148] sm:$0xff]
        %v387 = vld [vmem:[%s299 + $0x150] sm:$0xff]
        %v388 = vld [vmem:[%s299 + $0x158] sm:$0xff]
        %v389 = vld [vmem:[%s299 + $0x160] sm:$0xff]
        %v390 = vld [vmem:[%s299 + $0x168] sm:$0xff]
        %v391 = vld [vmem:[%s299 + $0x170] sm:$0xff]
        %v392 = vld [vmem:[%s299 + $0x178] sm:$0xff]
        %v393 = vld [vmem:[%s299 + $0x180] sm:$0xff]
        %v394 = vld [vmem:[%s299 + $0x188] sm:$0xff]
        %v395 = vld [vmem:[%s299 + $0x190] sm:$0xff]
        %v396 = vld [vmem:[%s299 + $0x198] sm:$0xff]
        %v397 = vld [vmem:[%s299 + $0x1a0] sm:$0xff]
        %v398 = vld [vmem:[%s299 + $0x1a8] sm:$0xff]
        %v399 = vld [vmem:[%s299 + $0x1b0] sm:$0xff]
        %v400 = vld [vmem:[%s299 + $0x1b8] sm:$0xff]
        %v401 = vld [vmem:[%s299 + $0x1c0] sm:$0xff]
        %v402 = vld [vmem:[%s299 + $0x1c8] sm:$0xff]
        %v403 = vld [vmem:[%s299 + $0x1d0] sm:$0xff]
        %v404 = vld [vmem:[%s299 + $0x1d8] sm:$0xff]
        %v405 = vld [vmem:[%s299 + $0x1e0] sm:$0xff]
        %v406 = vld [vmem:[%s299 + $0x1e8] sm:$0xff]
        %v407 = vld [vmem:[%s299 + $0x1f0] sm:$0xff]
        %v408 = vld [vmem:[%s299 + $0x1f8] sm:$0xff]
        %v409 = vpack.c.bf16 %v347, %v345
        %v410 = vpack.c.bf16 %v348, %v346
        %v411 = vpack.c.bf16 %v351, %v349
        %v412 = vpack.c.bf16 %v352, %v350
        %v413 = vpack.c.bf16 %v355, %v353
        %v414 = vpack.c.bf16 %v356, %v354
        %v415 = vpack.c.bf16 %v359, %v357
        %v416 = vpack.c.bf16 %v360, %v358
        %v417 = vpack.c.bf16 %v363, %v361
        %v418 = vpack.c.bf16 %v364, %v362
        %v419 = vpack.c.bf16 %v367, %v365
        %v420 = vpack.c.bf16 %v368, %v366
        %v421 = vpack.c.bf16 %v371, %v369
        %v422 = vpack.c.bf16 %v372, %v370
        %v423 = vpack.c.bf16 %v375, %v373
        %v424 = vpack.c.bf16 %v376, %v374
        %v425 = vpack.c.bf16 %v379, %v377
        %v426 = vpack.c.bf16 %v380, %v378
        %v427 = vpack.c.bf16 %v383, %v381
        %v428 = vpack.c.bf16 %v384, %v382
        %v429 = vpack.c.bf16 %v387, %v385
        %v430 = vpack.c.bf16 %v388, %v386
        %v431 = vpack.c.bf16 %v391, %v389
        %v432 = vpack.c.bf16 %v392, %v390
        %v433 = vpack.c.bf16 %v395, %v393
        %v434 = vpack.c.bf16 %v396, %v394
        %v435 = vpack.c.bf16 %v399, %v397
        %v436 = vpack.c.bf16 %v400, %v398
        %v437 = vpack.c.bf16 %v403, %v401
        %v438 = vpack.c.bf16 %v404, %v402
        %v439 = vpack.c.bf16 %v407, %v405
        %v440 = vpack.c.bf16 %v408, %v406
        %v441 = vld [vmem:[#allocation5] sm:$0xf]
        %v442 = vld [vmem:[#allocation5 + $0x4] sm:$0xf]
        %v443 = vld [vmem:[#allocation5 + $0x8] sm:$0xf]
        %v444 = vld [vmem:[#allocation5 + $0xc] sm:$0xf]
        %v445 = vld [vmem:[#allocation5 + $0x10] sm:$0xf]
        %v446 = vld [vmem:[#allocation5 + $0x14] sm:$0xf]
        %v447 = vld [vmem:[#allocation5 + $0x18] sm:$0xf]
        %v448 = vld [vmem:[#allocation5 + $0x1c] sm:$0xf]
        %v449 = vld [vmem:[#allocation5 + $0x20] sm:$0xf]
        %v450 = vld [vmem:[#allocation5 + $0x24] sm:$0xf]
        %v451 = vld [vmem:[#allocation5 + $0x28] sm:$0xf]
        %v452 = vld [vmem:[#allocation5 + $0x2c] sm:$0xf]
        %v453 = vld [vmem:[#allocation5 + $0x30] sm:$0xf]
        %v454 = vld [vmem:[#allocation5 + $0x34] sm:$0xf]
        %v455 = vld [vmem:[#allocation5 + $0x38] sm:$0xf]
        %v456 = vld [vmem:[#allocation5 + $0x3c] sm:$0xf]
        %v457 = vld [vmem:[#allocation5 + $0x40] sm:$0xf]
        %v458 = vld [vmem:[#allocation5 + $0x44] sm:$0xf]
        %v459 = vld [vmem:[#allocation5 + $0x48] sm:$0xf]
        %v460 = vld [vmem:[#allocation5 + $0x4c] sm:$0xf]
        %v461 = vld [vmem:[#allocation5 + $0x50] sm:$0xf]
        %v462 = vld [vmem:[#allocation5 + $0x54] sm:$0xf]
        %v463 = vld [vmem:[#allocation5 + $0x58] sm:$0xf]
        %v464 = vld [vmem:[#allocation5 + $0x5c] sm:$0xf]
        %v465 = vld [vmem:[#allocation5 + $0x60] sm:$0xf]
        %v466 = vld [vmem:[#allocation5 + $0x64] sm:$0xf]
        %v467 = vld [vmem:[#allocation5 + $0x68] sm:$0xf]
        %v468 = vld [vmem:[#allocation5 + $0x6c] sm:$0xf]
        %v469 = vld [vmem:[#allocation5 + $0x70] sm:$0xf]
        %v470 = vld [vmem:[#allocation5 + $0x74] sm:$0xf]
        %v471 = vld [vmem:[#allocation5 + $0x78] sm:$0xf]
        %v472 = vld [vmem:[#allocation5 + $0x7c] sm:$0xf]
        %v473 = vld [vmem:[%s2] sm:$0x1]
        %v475 = vlaneseq
        %v476 = vshrl.u32 %v475, 7
        %v477 = vsub.s32 0, %v476
        %v478 = vrot.slane %v473, %v477
        %v512 = vunpack.c.l.b16 %v441
        %v513 = vunpack.c.l.b16 %v442
        %v514 = vunpack.c.l.b16 %v443
        %v515 = vunpack.c.l.b16 %v444
        %v516 = vunpack.c.l.b16 %v445
        %v517 = vunpack.c.l.b16 %v446
        %v518 = vunpack.c.l.b16 %v447
        %v519 = vunpack.c.l.b16 %v448
        %v520 = vunpack.c.l.b16 %v449
        %v521 = vunpack.c.l.b16 %v450
        %v522 = vunpack.c.l.b16 %v451
        %v523 = vunpack.c.l.b16 %v452
        %v524 = vunpack.c.l.b16 %v453
        %v525 = vunpack.c.l.b16 %v454
        %v526 = vunpack.c.l.b16 %v455
        %v527 = vunpack.c.l.b16 %v456
        %v528 = vunpack.c.l.b16 %v457
        %v529 = vunpack.c.l.b16 %v458
        %v530 = vunpack.c.l.b16 %v459
        %v531 = vunpack.c.l.b16 %v460
        %v532 = vunpack.c.l.b16 %v461
        %v533 = vunpack.c.l.b16 %v462
        %v534 = vunpack.c.l.b16 %v463
        %v535 = vunpack.c.l.b16 %v464
        %v536 = vunpack.c.l.b16 %v465
        %v537 = vunpack.c.l.b16 %v466
        %v538 = vunpack.c.l.b16 %v467
        %v539 = vunpack.c.l.b16 %v468
        %v540 = vunpack.c.l.b16 %v469
        %v541 = vunpack.c.l.b16 %v470
        %v542 = vunpack.c.l.b16 %v471
        %v543 = vunpack.c.l.b16 %v472
        %v544 = vpack.c.b16 %v513, %v512
        %v545 = vpack.c.b16 %v515, %v514
        %v546 = vpack.c.b16 %v517, %v516
        %v547 = vpack.c.b16 %v519, %v518
        %v548 = vpack.c.b16 %v521, %v520
        %v549 = vpack.c.b16 %v523, %v522
        %v550 = vpack.c.b16 %v525, %v524
        %v551 = vpack.c.b16 %v527, %v526
        %v552 = vpack.c.b16 %v529, %v528
        %v553 = vpack.c.b16 %v531, %v530
        %v554 = vpack.c.b16 %v533, %v532
        %v555 = vpack.c.b16 %v535, %v534
        %v556 = vpack.c.b16 %v537, %v536
        %v557 = vpack.c.b16 %v539, %v538
        %v558 = vpack.c.b16 %v541, %v540
        %v559 = vpack.c.b16 %v543, %v542
        %576 = vmatprep.subr.bf16.mxu0 0
        %577 = vmatpush1.bf16.msra.mxu0 %v551
        %578 = vmatprep.subr.bf16.mxu0 0
        %579 = vmatpush1.bf16.msra.mxu0 %v550
        %580 = vmatprep.subr.bf16.mxu0 0
        %581 = vmatpush1.bf16.msra.mxu0 %v549
        %582 = vmatprep.subr.bf16.mxu0 0
        %583 = vmatpush1.bf16.msra.mxu0 %v548
        %584 = vmatprep.subr.bf16.mxu0 0
        %585 = vmatpush1.bf16.msra.mxu0 %v547
        %586 = vmatprep.subr.bf16.mxu0 0
        %587 = vmatpush1.bf16.msra.mxu0 %v546
        %588 = vmatprep.subr.bf16.mxu0 0
        %589 = vmatpush1.bf16.msra.mxu0 %v545
        %590 = vmatprep.subr.bf16.mxu0 0
        %591 = vmatpush1.bf16.msra.mxu0 %v544
        %592 = vmatprep.subr.bf16.mxu0 0
        %593 = vmatpush2.bf16.msra.mxu0 %v559
        %594 = vmatprep.subr.bf16.mxu0 0
        %595 = vmatpush2.bf16.msra.mxu0 %v558
        %596 = vmatprep.subr.bf16.mxu0 0
        %597 = vmatpush2.bf16.msra.mxu0 %v557
        %598 = vmatprep.subr.bf16.mxu0 0
        %599 = vmatpush2.bf16.msra.mxu0 %v556
        %600 = vmatprep.subr.bf16.mxu0 0
        %601 = vmatpush2.bf16.msra.mxu0 %v555
        %602 = vmatprep.subr.bf16.mxu0 0
        %603 = vmatpush2.bf16.msra.mxu0 %v554
        %604 = vmatprep.subr.bf16.mxu0 0
        %605 = vmatpush2.bf16.msra.mxu0 %v553
        %606 = vmatprep.subr.bf16.mxu0 0
        %607 = vmatpush2.bf16.msra.mxu0 %v552
        %608 = vmatprep.mubr.bf16.mxu0 %v410
        %609 = vmatmul.mubr.bf16.gmra.mxu0 %v409
        %v610 = vpop.f32.mrf.mxu0
        %v611 = vadd.f32 %v478, %v610
        %v612 = vpop.f32.mrf.mxu0
        %v613 = vpop.f32.mrf.mxu0
        %v614 = vadd.f32 %v478, %v613
        %v615 = vpop.f32.mrf.mxu0
        %616 = vmatprep.mubr.bf16.mxu0 %v412
        %617 = vmatmul.mubr.bf16.gmra.mxu0 %v411
        %v618 = vpop.f32.mrf.mxu0
        %v619 = vadd.f32 %v478, %v618
        %v620 = vpop.f32.mrf.mxu0
        %v621 = vpop.f32.mrf.mxu0
        %v622 = vadd.f32 %v478, %v621
        %v623 = vpop.f32.mrf.mxu0
        %624 = vmatprep.mubr.bf16.mxu0 %v414
        %625 = vmatmul.mubr.bf16.gmra.mxu0 %v413
        %v626 = vpop.f32.mrf.mxu0
        %v627 = vadd.f32 %v478, %v626
        %v628 = vpop.f32.mrf.mxu0
        %v629 = vpop.f32.mrf.mxu0
        %v630 = vadd.f32 %v478, %v629
        %v631 = vpop.f32.mrf.mxu0
        %632 = vmatprep.mubr.bf16.mxu0 %v416
        %633 = vmatmul.mubr.bf16.gmra.mxu0 %v415
        %v634 = vpop.f32.mrf.mxu0
        %v635 = vadd.f32 %v478, %v634
        %v636 = vpop.f32.mrf.mxu0
        %v637 = vpop.f32.mrf.mxu0
        %v638 = vadd.f32 %v478, %v637
        %v639 = vpop.f32.mrf.mxu0
        %640 = vmatprep.mubr.bf16.mxu0 %v418
        %641 = vmatmul.mubr.bf16.gmra.mxu0 %v417
        %v642 = vpop.f32.mrf.mxu0
        %v643 = vadd.f32 %v478, %v642
        %v644 = vpop.f32.mrf.mxu0
        %v645 = vpop.f32.mrf.mxu0
        %v646 = vadd.f32 %v478, %v645
        %v647 = vpop.f32.mrf.mxu0
        %648 = vmatprep.mubr.bf16.mxu0 %v420
        %649 = vmatmul.mubr.bf16.gmra.mxu0 %v419
        %v650 = vpop.f32.mrf.mxu0
        %v651 = vadd.f32 %v478, %v650
        %v652 = vpop.f32.mrf.mxu0
        %v653 = vpop.f32.mrf.mxu0
        %v654 = vadd.f32 %v478, %v653
        %v655 = vpop.f32.mrf.mxu0
        %656 = vmatprep.mubr.bf16.mxu0 %v422
        %657 = vmatmul.mubr.bf16.gmra.mxu0 %v421
        %v658 = vpop.f32.mrf.mxu0
        %v659 = vadd.f32 %v478, %v658
        %v660 = vpop.f32.mrf.mxu0
        %v661 = vpop.f32.mrf.mxu0
        %v662 = vadd.f32 %v478, %v661
        %v663 = vpop.f32.mrf.mxu0
        %664 = vmatprep.mubr.bf16.mxu0 %v424
        %665 = vmatmul.mubr.bf16.gmra.mxu0 %v423
        %v666 = vpop.f32.mrf.mxu0
        %v667 = vadd.f32 %v478, %v666
        %v668 = vpop.f32.mrf.mxu0
        %v669 = vpop.f32.mrf.mxu0
        %v670 = vadd.f32 %v478, %v669
        %v671 = vpop.f32.mrf.mxu0
        %672 = vmatprep.mubr.bf16.mxu0 %v426
        %673 = vmatmul.mubr.bf16.gmra.mxu0 %v425
        %v674 = vpop.f32.mrf.mxu0
        %v675 = vadd.f32 %v478, %v674
        %v676 = vpop.f32.mrf.mxu0
        %v677 = vpop.f32.mrf.mxu0
        %v678 = vadd.f32 %v478, %v677
        %v679 = vpop.f32.mrf.mxu0
        %680 = vmatprep.mubr.bf16.mxu0 %v428
        %681 = vmatmul.mubr.bf16.gmra.mxu0 %v427
        %v682 = vpop.f32.mrf.mxu0
        %v683 = vadd.f32 %v478, %v682
        %v684 = vpop.f32.mrf.mxu0
        %v685 = vpop.f32.mrf.mxu0
        %v686 = vadd.f32 %v478, %v685
        %v687 = vpop.f32.mrf.mxu0
        %688 = vmatprep.mubr.bf16.mxu0 %v430
        %689 = vmatmul.mubr.bf16.gmra.mxu0 %v429
        %v690 = vpop.f32.mrf.mxu0
        %v691 = vadd.f32 %v478, %v690
        %v692 = vpop.f32.mrf.mxu0
        %v693 = vpop.f32.mrf.mxu0
        %v694 = vadd.f32 %v478, %v693
        %v695 = vpop.f32.mrf.mxu0
        %696 = vmatprep.mubr.bf16.mxu0 %v432
        %697 = vmatmul.mubr.bf16.gmra.mxu0 %v431
        %v698 = vpop.f32.mrf.mxu0
        %v699 = vadd.f32 %v478, %v698
        %v700 = vpop.f32.mrf.mxu0
        %v701 = vpop.f32.mrf.mxu0
        %v702 = vadd.f32 %v478, %v701
        %v703 = vpop.f32.mrf.mxu0
        %704 = vmatprep.mubr.bf16.mxu0 %v434
        %705 = vmatmul.mubr.bf16.gmra.mxu0 %v433
        %v706 = vpop.f32.mrf.mxu0
        %v707 = vadd.f32 %v478, %v706
        %v708 = vpop.f32.mrf.mxu0
        %v709 = vpop.f32.mrf.mxu0
        %v710 = vadd.f32 %v478, %v709
        %v711 = vpop.f32.mrf.mxu0
        %712 = vmatprep.mubr.bf16.mxu0 %v436
        %713 = vmatmul.mubr.bf16.gmra.mxu0 %v435
        %v714 = vpop.f32.mrf.mxu0
        %v715 = vadd.f32 %v478, %v714
        %v716 = vpop.f32.mrf.mxu0
        %v717 = vpop.f32.mrf.mxu0
        %v718 = vadd.f32 %v478, %v717
        %v719 = vpop.f32.mrf.mxu0
        %720 = vmatprep.mubr.bf16.mxu0 %v438
        %721 = vmatmul.mubr.bf16.gmra.mxu0 %v437
        %v722 = vpop.f32.mrf.mxu0
        %v723 = vadd.f32 %v478, %v722
        %v724 = vpop.f32.mrf.mxu0
        %v725 = vpop.f32.mrf.mxu0
        %v726 = vadd.f32 %v478, %v725
        %v727 = vpop.f32.mrf.mxu0
        %728 = vmatprep.mubr.bf16.mxu0 %v440
        %729 = vmatmul.mubr.bf16.gmra.mxu0 %v439
        %v730 = vpop.f32.mrf.mxu0
        %v731 = vadd.f32 %v478, %v730
        %v732 = vpop.f32.mrf.mxu0
        %v733 = vpop.f32.mrf.mxu0
        %v734 = vadd.f32 %v478, %v733
        %v735 = vpop.f32.mrf.mxu0
        %736 = vdwg.mxu0
        %v737 = vmax.f32 %v611, 0.0
        %v738 = vmax.f32 %v614, 0.0
        %v739 = vmax.f32 %v619, 0.0
        %v740 = vmax.f32 %v622, 0.0
        %v741 = vmax.f32 %v627, 0.0
        %v742 = vmax.f32 %v630, 0.0
        %v743 = vmax.f32 %v635, 0.0
        %v744 = vmax.f32 %v638, 0.0
        %v745 = vmax.f32 %v643, 0.0
        %v746 = vmax.f32 %v646, 0.0
        %v747 = vmax.f32 %v651, 0.0
        %v748 = vmax.f32 %v654, 0.0
        %v749 = vmax.f32 %v659, 0.0
        %v750 = vmax.f32 %v662, 0.0
        %v751 = vmax.f32 %v667, 0.0
        %v752 = vmax.f32 %v670, 0.0
        %v753 = vmax.f32 %v675, 0.0
        %v754 = vmax.f32 %v678, 0.0
        %v755 = vmax.f32 %v683, 0.0
        %v756 = vmax.f32 %v686, 0.0
        %v757 = vmax.f32 %v691, 0.0
        %v758 = vmax.f32 %v694, 0.0
        %v759 = vmax.f32 %v699, 0.0
        %v760 = vmax.f32 %v702, 0.0
        %v761 = vmax.f32 %v707, 0.0
        %v762 = vmax.f32 %v710, 0.0
        %v763 = vmax.f32 %v715, 0.0
        %v764 = vmax.f32 %v718, 0.0
        %v765 = vmax.f32 %v723, 0.0
        %v766 = vmax.f32 %v726, 0.0
        %v767 = vmax.f32 %v731, 0.0
        %v768 = vmax.f32 %v734, 0.0
        %v769 = vpack.c.bf16 %v738, %v737
        %v770 = vpack.c.bf16 %v740, %v739
        %v771 = vpack.c.bf16 %v742, %v741
        %v772 = vpack.c.bf16 %v744, %v743
        %v773 = vpack.c.bf16 %v746, %v745
        %v774 = vpack.c.bf16 %v748, %v747
        %v775 = vpack.c.bf16 %v750, %v749
        %v776 = vpack.c.bf16 %v752, %v751
        %v777 = vpack.c.bf16 %v754, %v753
        %v778 = vpack.c.bf16 %v756, %v755
        %v779 = vpack.c.bf16 %v758, %v757
        %v780 = vpack.c.bf16 %v760, %v759
        %v781 = vpack.c.bf16 %v762, %v761
        %v782 = vpack.c.bf16 %v764, %v763
        %v783 = vpack.c.bf16 %v766, %v765
        %v784 = vpack.c.bf16 %v768, %v767
        %v785 = vld [vmem:[#allocation7] sm:$0xf]
        %v786 = vld [vmem:[#allocation7 + $0x4] sm:$0xf]
        %v787 = vld [vmem:[#allocation7 + $0x8] sm:$0xf]
        %v788 = vld [vmem:[#allocation7 + $0xc] sm:$0xf]
        %v789 = vld [vmem:[#allocation7 + $0x10] sm:$0xf]
        %v790 = vld [vmem:[#allocation7 + $0x14] sm:$0xf]
        %v791 = vld [vmem:[#allocation7 + $0x18] sm:$0xf]
        %v792 = vld [vmem:[#allocation7 + $0x1c] sm:$0xf]
        %v793 = vld [vmem:[#allocation7 + $0x20] sm:$0xf]
        %v794 = vld [vmem:[#allocation7 + $0x24] sm:$0xf]
        %v795 = vld [vmem:[#allocation7 + $0x28] sm:$0xf]
        %v796 = vld [vmem:[#allocation7 + $0x2c] sm:$0xf]
        %v797 = vld [vmem:[#allocation7 + $0x30] sm:$0xf]
        %v798 = vld [vmem:[#allocation7 + $0x34] sm:$0xf]
        %v799 = vld [vmem:[#allocation7 + $0x38] sm:$0xf]
        %v800 = vld [vmem:[#allocation7 + $0x3c] sm:$0xf]
        %v801 = vld [vmem:[%s4] sm:$0x1]
        %v803 = vlaneseq
        %v804 = vshrl.u32 %v803, 7
        %v805 = vsub.s32 0, %v804
        %v806 = vrot.slane %v801, %v805
        %v824 = vunpack.c.l.b16 %v785
        %v825 = vunpack.c.l.b16 %v786
        %v826 = vunpack.c.l.b16 %v787
        %v827 = vunpack.c.l.b16 %v788
        %v828 = vunpack.c.l.b16 %v789
        %v829 = vunpack.c.l.b16 %v790
        %v830 = vunpack.c.l.b16 %v791
        %v831 = vunpack.c.l.b16 %v792
        %v832 = vunpack.c.l.b16 %v793
        %v833 = vunpack.c.l.b16 %v794
        %v834 = vunpack.c.l.b16 %v795
        %v835 = vunpack.c.l.b16 %v796
        %v836 = vunpack.c.l.b16 %v797
        %v837 = vunpack.c.l.b16 %v798
        %v838 = vunpack.c.l.b16 %v799
        %v839 = vunpack.c.l.b16 %v800
        %v840 = vpack.c.b16 %v825, %v824
        %v841 = vpack.c.b16 %v827, %v826
        %v842 = vpack.c.b16 %v829, %v828
        %v843 = vpack.c.b16 %v831, %v830
        %v844 = vpack.c.b16 %v833, %v832
        %v845 = vpack.c.b16 %v835, %v834
        %v846 = vpack.c.b16 %v837, %v836
        %v847 = vpack.c.b16 %v839, %v838
        %856 = vmatprep.subr.bf16.mxu0 0
        %857 = vmatpush1.bf16.msra.mxu0 %v847
        %858 = vmatprep.subr.bf16.mxu0 0
        %859 = vmatpush1.bf16.msra.mxu0 %v846
        %860 = vmatprep.subr.bf16.mxu0 0
        %861 = vmatpush1.bf16.msra.mxu0 %v845
        %862 = vmatprep.subr.bf16.mxu0 0
        %863 = vmatpush1.bf16.msra.mxu0 %v844
        %864 = vmatprep.subr.bf16.mxu0 0
        %865 = vmatpush1.bf16.msra.mxu0 %v843
        %866 = vmatprep.subr.bf16.mxu0 0
        %867 = vmatpush1.bf16.msra.mxu0 %v842
        %868 = vmatprep.subr.bf16.mxu0 0
        %869 = vmatpush1.bf16.msra.mxu0 %v841
        %870 = vmatprep.subr.bf16.mxu0 0
        %871 = vmatpush1.bf16.msra.mxu0 %v840
        %872 = vmatprep.subr.bf16.mxu0 0
        %873 = vmatpush2.bf16.msra.mxu0 0
        %874 = vmatprep.subr.bf16.mxu0 0
        %875 = vmatpush2.bf16.msra.mxu0 0
        %876 = vmatprep.subr.bf16.mxu0 0
        %877 = vmatpush2.bf16.msra.mxu0 0
        %878 = vmatprep.subr.bf16.mxu0 0
        %879 = vmatpush2.bf16.msra.mxu0 0
        %880 = vmatprep.subr.bf16.mxu0 0
        %881 = vmatpush2.bf16.msra.mxu0 0
        %882 = vmatprep.subr.bf16.mxu0 0
        %883 = vmatpush2.bf16.msra.mxu0 0
        %884 = vmatprep.subr.bf16.mxu0 0
        %885 = vmatpush2.bf16.msra.mxu0 0
        %886 = vmatprep.subr.bf16.mxu0 0
        %887 = vmatpush2.bf16.msra.mxu0 0
        %888 = vmatprep.mubr.bf16.mxu0 0
        %889 = vmatmul.mubr.bf16.gmra.mxu0 %v769
        %v890 = vpop.f32.mrf.mxu0
        %v891 = vadd.f32 %v806, %v890
        %v892 = vpop.f32.mrf.mxu0
        %v893 = vpop.f32.mrf.mxu0
        %v894 = vadd.f32 %v806, %v893
        %v895 = vpop.f32.mrf.mxu0
        %896 = vmatprep.mubr.bf16.mxu0 0
        %897 = vmatmul.mubr.bf16.gmra.mxu0 %v770
        %v898 = vpop.f32.mrf.mxu0
        %v899 = vadd.f32 %v806, %v898
        %v900 = vpop.f32.mrf.mxu0
        %v901 = vpop.f32.mrf.mxu0
        %v902 = vadd.f32 %v806, %v901
        %v903 = vpop.f32.mrf.mxu0
        %904 = vmatprep.mubr.bf16.mxu0 0
        %905 = vmatmul.mubr.bf16.gmra.mxu0 %v771
        %v906 = vpop.f32.mrf.mxu0
        %v907 = vadd.f32 %v806, %v906
        %v908 = vpop.f32.mrf.mxu0
        %v909 = vpop.f32.mrf.mxu0
        %v910 = vadd.f32 %v806, %v909
        %v911 = vpop.f32.mrf.mxu0
        %912 = vmatprep.mubr.bf16.mxu0 0
        %913 = vmatmul.mubr.bf16.gmra.mxu0 %v772
        %v914 = vpop.f32.mrf.mxu0
        %v915 = vadd.f32 %v806, %v914
        %v916 = vpop.f32.mrf.mxu0
        %v917 = vpop.f32.mrf.mxu0
        %v918 = vadd.f32 %v806, %v917
        %v919 = vpop.f32.mrf.mxu0
        %920 = vmatprep.mubr.bf16.mxu0 0
        %921 = vmatmul.mubr.bf16.gmra.mxu0 %v773
        %v922 = vpop.f32.mrf.mxu0
        %v923 = vadd.f32 %v806, %v922
        %v924 = vpop.f32.mrf.mxu0
        %v925 = vpop.f32.mrf.mxu0
        %v926 = vadd.f32 %v806, %v925
        %v927 = vpop.f32.mrf.mxu0
        %928 = vmatprep.mubr.bf16.mxu0 0
        %929 = vmatmul.mubr.bf16.gmra.mxu0 %v774
        %v930 = vpop.f32.mrf.mxu0
        %v931 = vadd.f32 %v806, %v930
        %v932 = vpop.f32.mrf.mxu0
        %v933 = vpop.f32.mrf.mxu0
        %v934 = vadd.f32 %v806, %v933
        %v935 = vpop.f32.mrf.mxu0
        %936 = vmatprep.mubr.bf16.mxu0 0
        %937 = vmatmul.mubr.bf16.gmra.mxu0 %v775
        %v938 = vpop.f32.mrf.mxu0
        %v939 = vadd.f32 %v806, %v938
        %v940 = vpop.f32.mrf.mxu0
        %v941 = vpop.f32.mrf.mxu0
        %v942 = vadd.f32 %v806, %v941
        %v943 = vpop.f32.mrf.mxu0
        %944 = vmatprep.mubr.bf16.mxu0 0
        %945 = vmatmul.mubr.bf16.gmra.mxu0 %v776
        %v946 = vpop.f32.mrf.mxu0
        %v947 = vadd.f32 %v806, %v946
        %v948 = vpop.f32.mrf.mxu0
        %v949 = vpop.f32.mrf.mxu0
        %v950 = vadd.f32 %v806, %v949
        %v951 = vpop.f32.mrf.mxu0
        %952 = vmatprep.mubr.bf16.mxu0 0
        %953 = vmatmul.mubr.bf16.gmra.mxu0 %v777
        %v954 = vpop.f32.mrf.mxu0
        %v955 = vadd.f32 %v806, %v954
        %v956 = vpop.f32.mrf.mxu0
        %v957 = vpop.f32.mrf.mxu0
        %v958 = vadd.f32 %v806, %v957
        %v959 = vpop.f32.mrf.mxu0
        %960 = vmatprep.mubr.bf16.mxu0 0
        %961 = vmatmul.mubr.bf16.gmra.mxu0 %v778
        %v962 = vpop.f32.mrf.mxu0
        %v963 = vadd.f32 %v806, %v962
        %v964 = vpop.f32.mrf.mxu0
        %v965 = vpop.f32.mrf.mxu0
        %v966 = vadd.f32 %v806, %v965
        %v967 = vpop.f32.mrf.mxu0
        %968 = vmatprep.mubr.bf16.mxu0 0
        %969 = vmatmul.mubr.bf16.gmra.mxu0 %v779
        %v970 = vpop.f32.mrf.mxu0
        %v971 = vadd.f32 %v806, %v970
        %v972 = vpop.f32.mrf.mxu0
        %v973 = vpop.f32.mrf.mxu0
        %v974 = vadd.f32 %v806, %v973
        %v975 = vpop.f32.mrf.mxu0
        %976 = vmatprep.mubr.bf16.mxu0 0
        %977 = vmatmul.mubr.bf16.gmra.mxu0 %v780
        %v978 = vpop.f32.mrf.mxu0
        %v979 = vadd.f32 %v806, %v978
        %v980 = vpop.f32.mrf.mxu0
        %v981 = vpop.f32.mrf.mxu0
        %v982 = vadd.f32 %v806, %v981
        %v983 = vpop.f32.mrf.mxu0
        %984 = vmatprep.mubr.bf16.mxu0 0
        %985 = vmatmul.mubr.bf16.gmra.mxu0 %v781
        %v986 = vpop.f32.mrf.mxu0
        %v987 = vadd.f32 %v806, %v986
        %v988 = vpop.f32.mrf.mxu0
        %v989 = vpop.f32.mrf.mxu0
        %v990 = vadd.f32 %v806, %v989
        %v991 = vpop.f32.mrf.mxu0
        %992 = vmatprep.mubr.bf16.mxu0 0
        %993 = vmatmul.mubr.bf16.gmra.mxu0 %v782
        %v994 = vpop.f32.mrf.mxu0
        %v995 = vadd.f32 %v806, %v994
        %v996 = vpop.f32.mrf.mxu0
        %v997 = vpop.f32.mrf.mxu0
        %v998 = vadd.f32 %v806, %v997
        %v999 = vpop.f32.mrf.mxu0
        %1000 = vmatprep.mubr.bf16.mxu0 0
        %1001 = vmatmul.mubr.bf16.gmra.mxu0 %v783
        %v1002 = vpop.f32.mrf.mxu0
        %v1003 = vadd.f32 %v806, %v1002
        %v1004 = vpop.f32.mrf.mxu0
        %v1005 = vpop.f32.mrf.mxu0
        %v1006 = vadd.f32 %v806, %v1005
        %v1007 = vpop.f32.mrf.mxu0
        %1008 = vmatprep.mubr.bf16.mxu0 0
        %1009 = vmatmul.mubr.bf16.gmra.mxu0 %v784
        %v1010 = vpop.f32.mrf.mxu0
        %v1011 = vadd.f32 %v806, %v1010
        %v1012 = vpop.f32.mrf.mxu0
        %v1013 = vpop.f32.mrf.mxu0
        %v1014 = vadd.f32 %v806, %v1013
        %v1015 = vpop.f32.mrf.mxu0
        %1016 = vdwg.mxu0
        %v1017 = vmax.f32 %v891, 0.0
        %v1018 = vmax.f32 %v894, 0.0
        %v1019 = vmax.f32 %v899, 0.0
        %v1020 = vmax.f32 %v902, 0.0
        %v1021 = vmax.f32 %v907, 0.0
        %v1022 = vmax.f32 %v910, 0.0
        %v1023 = vmax.f32 %v915, 0.0
        %v1024 = vmax.f32 %v918, 0.0
        %v1025 = vmax.f32 %v923, 0.0
        %v1026 = vmax.f32 %v926, 0.0
        %v1027 = vmax.f32 %v931, 0.0
        %v1028 = vmax.f32 %v934, 0.0
        %v1029 = vmax.f32 %v939, 0.0
        %v1030 = vmax.f32 %v942, 0.0
        %v1031 = vmax.f32 %v947, 0.0
        %v1032 = vmax.f32 %v950, 0.0
        %v1033 = vmax.f32 %v955, 0.0
        %v1034 = vmax.f32 %v958, 0.0
        %v1035 = vmax.f32 %v963, 0.0
        %v1036 = vmax.f32 %v966, 0.0
        %v1037 = vmax.f32 %v971, 0.0
        %v1038 = vmax.f32 %v974, 0.0
        %v1039 = vmax.f32 %v979, 0.0
        %v1040 = vmax.f32 %v982, 0.0
        %v1041 = vmax.f32 %v987, 0.0
        %v1042 = vmax.f32 %v990, 0.0
        %v1043 = vmax.f32 %v995, 0.0
        %v1044 = vmax.f32 %v998, 0.0
        %v1045 = vmax.f32 %v1003, 0.0
        %v1046 = vmax.f32 %v1006, 0.0
        %v1047 = vmax.f32 %v1011, 0.0
        %v1048 = vmax.f32 %v1014, 0.0
        %v1049 = vpack.c.bf16 %v1018, %v1017
        %v1050 = vpack.c.bf16 %v1020, %v1019
        %v1051 = vpack.c.bf16 %v1022, %v1021
        %v1052 = vpack.c.bf16 %v1024, %v1023
        %v1053 = vpack.c.bf16 %v1026, %v1025
        %v1054 = vpack.c.bf16 %v1028, %v1027
        %v1055 = vpack.c.bf16 %v1030, %v1029
        %v1056 = vpack.c.bf16 %v1032, %v1031
        %v1057 = vpack.c.bf16 %v1034, %v1033
        %v1058 = vpack.c.bf16 %v1036, %v1035
        %v1059 = vpack.c.bf16 %v1038, %v1037
        %v1060 = vpack.c.bf16 %v1040, %v1039
        %v1061 = vpack.c.bf16 %v1042, %v1041
        %v1062 = vpack.c.bf16 %v1044, %v1043
        %v1063 = vpack.c.bf16 %v1046, %v1045
        %v1064 = vpack.c.bf16 %v1048, %v1047
        %v1065 = vld [vmem:[#allocation8] sm:$0xf]
        %v1066 = vld [vmem:[#allocation8 + $0x4] sm:$0xf]
        %v1067 = vld [vmem:[#allocation8 + $0x8] sm:$0xf]
        %v1068 = vld [vmem:[#allocation8 + $0xc] sm:$0xf]
        %v1069 = vld [vmem:[#allocation8 + $0x10] sm:$0xf]
        %v1070 = vld [vmem:[#allocation8 + $0x14] sm:$0xf]
        %v1071 = vld [vmem:[#allocation8 + $0x18] sm:$0xf]
        %v1072 = vld [vmem:[#allocation8 + $0x1c] sm:$0xf]
        %v1073 = vld [vmem:[#allocation8 + $0x20] sm:$0xf]
        %v1074 = vld [vmem:[#allocation8 + $0x24] sm:$0xf]
        %v1075 = vld [vmem:[#allocation8 + $0x28] sm:$0xf]
        %v1076 = vld [vmem:[#allocation8 + $0x2c] sm:$0xf]
        %v1077 = vld [vmem:[#allocation8 + $0x30] sm:$0xf]
        %v1078 = vld [vmem:[#allocation8 + $0x34] sm:$0xf]
        %v1079 = vld [vmem:[#allocation8 + $0x38] sm:$0xf]
        %v1080 = vld [vmem:[#allocation8 + $0x3c] sm:$0xf]
        %v1081 = vld [vmem:[%s6] sm:$0x1]
        %v1083 = vlaneseq
        %v1084 = vshrl.u32 %v1083, 7
        %v1085 = vsub.s32 0, %v1084
        %v1086 = vrot.slane %v1081, %v1085
        %v1104 = vunpack.c.l.b16 %v1065
        %v1105 = vunpack.c.l.b16 %v1066
        %v1106 = vunpack.c.l.b16 %v1067
        %v1107 = vunpack.c.l.b16 %v1068
        %v1108 = vunpack.c.l.b16 %v1069
        %v1109 = vunpack.c.l.b16 %v1070
        %v1110 = vunpack.c.l.b16 %v1071
        %v1111 = vunpack.c.l.b16 %v1072
        %v1112 = vunpack.c.l.b16 %v1073
        %v1113 = vunpack.c.l.b16 %v1074
        %v1114 = vunpack.c.l.b16 %v1075
        %v1115 = vunpack.c.l.b16 %v1076
        %v1116 = vunpack.c.l.b16 %v1077
        %v1117 = vunpack.c.l.b16 %v1078
        %v1118 = vunpack.c.l.b16 %v1079
        %v1119 = vunpack.c.l.b16 %v1080
        %v1120 = vpack.c.b16 %v1105, %v1104
        %v1121 = vpack.c.b16 %v1107, %v1106
        %v1122 = vpack.c.b16 %v1109, %v1108
        %v1123 = vpack.c.b16 %v1111, %v1110
        %v1124 = vpack.c.b16 %v1113, %v1112
        %v1125 = vpack.c.b16 %v1115, %v1114
        %v1126 = vpack.c.b16 %v1117, %v1116
        %v1127 = vpack.c.b16 %v1119, %v1118
        %1136 = vmatprep.subr.bf16.mxu0 0
        %1137 = vmatpush1.bf16.msra.mxu0 %v1127
        %1138 = vmatprep.subr.bf16.mxu0 0
        %1139 = vmatpush1.bf16.msra.mxu0 %v1126
        %1140 = vmatprep.subr.bf16.mxu0 0
        %1141 = vmatpush1.bf16.msra.mxu0 %v1125
        %1142 = vmatprep.subr.bf16.mxu0 0
        %1143 = vmatpush1.bf16.msra.mxu0 %v1124
        %1144 = vmatprep.subr.bf16.mxu0 0
        %1145 = vmatpush1.bf16.msra.mxu0 %v1123
        %1146 = vmatprep.subr.bf16.mxu0 0
        %1147 = vmatpush1.bf16.msra.mxu0 %v1122
        %1148 = vmatprep.subr.bf16.mxu0 0
        %1149 = vmatpush1.bf16.msra.mxu0 %v1121
        %1150 = vmatprep.subr.bf16.mxu0 0
        %1151 = vmatpush1.bf16.msra.mxu0 %v1120
        %1152 = vmatprep.subr.bf16.mxu0 0
        %1153 = vmatpush2.bf16.msra.mxu0 0
        %1154 = vmatprep.subr.bf16.mxu0 0
        %1155 = vmatpush2.bf16.msra.mxu0 0
        %1156 = vmatprep.subr.bf16.mxu0 0
        %1157 = vmatpush2.bf16.msra.mxu0 0
        %1158 = vmatprep.subr.bf16.mxu0 0
        %1159 = vmatpush2.bf16.msra.mxu0 0
        %1160 = vmatprep.subr.bf16.mxu0 0
        %1161 = vmatpush2.bf16.msra.mxu0 0
        %1162 = vmatprep.subr.bf16.mxu0 0
        %1163 = vmatpush2.bf16.msra.mxu0 0
        %1164 = vmatprep.subr.bf16.mxu0 0
        %1165 = vmatpush2.bf16.msra.mxu0 0
        %1166 = vmatprep.subr.bf16.mxu0 0
        %1167 = vmatpush2.bf16.msra.mxu0 0
        %1168 = vmatprep.mubr.bf16.mxu0 0
        %1169 = vmatmul.mubr.bf16.gmra.mxu0 %v1049
        %v1170 = vpop.f32.mrf.mxu0
        %v1171 = vadd.f32 %v1086, %v1170
        %v1172 = vpop.f32.mrf.mxu0
        %v1173 = vpop.f32.mrf.mxu0
        %v1174 = vadd.f32 %v1086, %v1173
        %v1175 = vpop.f32.mrf.mxu0
        %1176 = vmatprep.mubr.bf16.mxu0 0
        %1177 = vmatmul.mubr.bf16.gmra.mxu0 %v1050
        %v1178 = vpop.f32.mrf.mxu0
        %v1179 = vadd.f32 %v1086, %v1178
        %v1180 = vpop.f32.mrf.mxu0
        %v1181 = vpop.f32.mrf.mxu0
        %v1182 = vadd.f32 %v1086, %v1181
        %v1183 = vpop.f32.mrf.mxu0
        %1184 = vmatprep.mubr.bf16.mxu0 0
        %1185 = vmatmul.mubr.bf16.gmra.mxu0 %v1051
        %v1186 = vpop.f32.mrf.mxu0
        %v1187 = vadd.f32 %v1086, %v1186
        %v1188 = vpop.f32.mrf.mxu0
        %v1189 = vpop.f32.mrf.mxu0
        %v1190 = vadd.f32 %v1086, %v1189
        %v1191 = vpop.f32.mrf.mxu0
        %1192 = vmatprep.mubr.bf16.mxu0 0
        %1193 = vmatmul.mubr.bf16.gmra.mxu0 %v1052
        %v1194 = vpop.f32.mrf.mxu0
        %v1195 = vadd.f32 %v1086, %v1194
        %v1196 = vpop.f32.mrf.mxu0
        %v1197 = vpop.f32.mrf.mxu0
        %v1198 = vadd.f32 %v1086, %v1197
        %v1199 = vpop.f32.mrf.mxu0
        %1200 = vmatprep.mubr.bf16.mxu0 0
        %1201 = vmatmul.mubr.bf16.gmra.mxu0 %v1053
        %v1202 = vpop.f32.mrf.mxu0
        %v1203 = vadd.f32 %v1086, %v1202
        %v1204 = vpop.f32.mrf.mxu0
        %v1205 = vpop.f32.mrf.mxu0
        %v1206 = vadd.f32 %v1086, %v1205
        %v1207 = vpop.f32.mrf.mxu0
        %1208 = vmatprep.mubr.bf16.mxu0 0
        %1209 = vmatmul.mubr.bf16.gmra.mxu0 %v1054
        %v1210 = vpop.f32.mrf.mxu0
        %v1211 = vadd.f32 %v1086, %v1210
        %v1212 = vpop.f32.mrf.mxu0
        %v1213 = vpop.f32.mrf.mxu0
        %v1214 = vadd.f32 %v1086, %v1213
        %v1215 = vpop.f32.mrf.mxu0
        %1216 = vmatprep.mubr.bf16.mxu0 0
        %1217 = vmatmul.mubr.bf16.gmra.mxu0 %v1055
        %v1218 = vpop.f32.mrf.mxu0
        %v1219 = vadd.f32 %v1086, %v1218
        %v1220 = vpop.f32.mrf.mxu0
        %v1221 = vpop.f32.mrf.mxu0
        %v1222 = vadd.f32 %v1086, %v1221
        %v1223 = vpop.f32.mrf.mxu0
        %1224 = vmatprep.mubr.bf16.mxu0 0
        %1225 = vmatmul.mubr.bf16.gmra.mxu0 %v1056
        %v1226 = vpop.f32.mrf.mxu0
        %v1227 = vadd.f32 %v1086, %v1226
        %v1228 = vpop.f32.mrf.mxu0
        %v1229 = vpop.f32.mrf.mxu0
        %v1230 = vadd.f32 %v1086, %v1229
        %v1231 = vpop.f32.mrf.mxu0
        %1232 = vmatprep.mubr.bf16.mxu0 0
        %1233 = vmatmul.mubr.bf16.gmra.mxu0 %v1057
        %v1234 = vpop.f32.mrf.mxu0
        %v1235 = vadd.f32 %v1086, %v1234
        %v1236 = vpop.f32.mrf.mxu0
        %v1237 = vpop.f32.mrf.mxu0
        %v1238 = vadd.f32 %v1086, %v1237
        %v1239 = vpop.f32.mrf.mxu0
        %1240 = vmatprep.mubr.bf16.mxu0 0
        %1241 = vmatmul.mubr.bf16.gmra.mxu0 %v1058
        %v1242 = vpop.f32.mrf.mxu0
        %v1243 = vadd.f32 %v1086, %v1242
        %v1244 = vpop.f32.mrf.mxu0
        %v1245 = vpop.f32.mrf.mxu0
        %v1246 = vadd.f32 %v1086, %v1245
        %v1247 = vpop.f32.mrf.mxu0
        %1248 = vmatprep.mubr.bf16.mxu0 0
        %1249 = vmatmul.mubr.bf16.gmra.mxu0 %v1059
        %v1250 = vpop.f32.mrf.mxu0
        %v1251 = vadd.f32 %v1086, %v1250
        %v1252 = vpop.f32.mrf.mxu0
        %v1253 = vpop.f32.mrf.mxu0
        %v1254 = vadd.f32 %v1086, %v1253
        %v1255 = vpop.f32.mrf.mxu0
        %1256 = vmatprep.mubr.bf16.mxu0 0
        %1257 = vmatmul.mubr.bf16.gmra.mxu0 %v1060
        %v1258 = vpop.f32.mrf.mxu0
        %v1259 = vadd.f32 %v1086, %v1258
        %v1260 = vpop.f32.mrf.mxu0
        %v1261 = vpop.f32.mrf.mxu0
        %v1262 = vadd.f32 %v1086, %v1261
        %v1263 = vpop.f32.mrf.mxu0
        %1264 = vmatprep.mubr.bf16.mxu0 0
        %1265 = vmatmul.mubr.bf16.gmra.mxu0 %v1061
        %v1266 = vpop.f32.mrf.mxu0
        %v1267 = vadd.f32 %v1086, %v1266
        %v1268 = vpop.f32.mrf.mxu0
        %v1269 = vpop.f32.mrf.mxu0
        %v1270 = vadd.f32 %v1086, %v1269
        %v1271 = vpop.f32.mrf.mxu0
        %1272 = vmatprep.mubr.bf16.mxu0 0
        %1273 = vmatmul.mubr.bf16.gmra.mxu0 %v1062
        %v1274 = vpop.f32.mrf.mxu0
        %v1275 = vadd.f32 %v1086, %v1274
        %v1276 = vpop.f32.mrf.mxu0
        %v1277 = vpop.f32.mrf.mxu0
        %v1278 = vadd.f32 %v1086, %v1277
        %v1279 = vpop.f32.mrf.mxu0
        %1280 = vmatprep.mubr.bf16.mxu0 0
        %1281 = vmatmul.mubr.bf16.gmra.mxu0 %v1063
        %v1282 = vpop.f32.mrf.mxu0
        %v1283 = vadd.f32 %v1086, %v1282
        %v1284 = vpop.f32.mrf.mxu0
        %v1285 = vpop.f32.mrf.mxu0
        %v1286 = vadd.f32 %v1086, %v1285
        %v1287 = vpop.f32.mrf.mxu0
        %1288 = vmatprep.mubr.bf16.mxu0 0
        %1289 = vmatmul.mubr.bf16.gmra.mxu0 %v1064
        %v1290 = vpop.f32.mrf.mxu0
        %v1291 = vadd.f32 %v1086, %v1290
        %v1292 = vpop.f32.mrf.mxu0
        %v1293 = vpop.f32.mrf.mxu0
        %v1294 = vadd.f32 %v1086, %v1293
        %v1295 = vpop.f32.mrf.mxu0
        %1296 = vdwg.mxu0
        %v1297 = vpack.c.bf16 %v1174, %v1171
        %v1298 = vpack.c.bf16 %v1182, %v1179
        %v1299 = vpack.c.bf16 %v1190, %v1187
        %v1300 = vpack.c.bf16 %v1198, %v1195
        %v1301 = vpack.c.bf16 %v1206, %v1203
        %v1302 = vpack.c.bf16 %v1214, %v1211
        %v1303 = vpack.c.bf16 %v1222, %v1219
        %v1304 = vpack.c.bf16 %v1230, %v1227
        %v1305 = vpack.c.bf16 %v1238, %v1235
        %v1306 = vpack.c.bf16 %v1246, %v1243
        %v1307 = vpack.c.bf16 %v1254, %v1251
        %v1308 = vpack.c.bf16 %v1262, %v1259
        %v1309 = vpack.c.bf16 %v1270, %v1267
        %v1310 = vpack.c.bf16 %v1278, %v1275
        %v1311 = vpack.c.bf16 %v1286, %v1283
        %v1312 = vpack.c.bf16 %v1294, %v1291
        %v1329 = vunpack.c.l.b16 %v1297
        %v1330 = vunpack.c.h.b16 %v1297
        %v1331 = vunpack.c.l.b16 %v1298
        %v1332 = vunpack.c.h.b16 %v1298
        %v1333 = vunpack.c.l.b16 %v1299
        %v1334 = vunpack.c.h.b16 %v1299
        %v1335 = vunpack.c.l.b16 %v1300
        %v1336 = vunpack.c.h.b16 %v1300
        %v1337 = vunpack.c.l.b16 %v1301
        %v1338 = vunpack.c.h.b16 %v1301
        %v1339 = vunpack.c.l.b16 %v1302
        %v1340 = vunpack.c.h.b16 %v1302
        %v1341 = vunpack.c.l.b16 %v1303
        %v1342 = vunpack.c.h.b16 %v1303
        %v1343 = vunpack.c.l.b16 %v1304
        %v1344 = vunpack.c.h.b16 %v1304
        %v1345 = vunpack.c.l.b16 %v1305
        %v1346 = vunpack.c.h.b16 %v1305
        %v1347 = vunpack.c.l.b16 %v1306
        %v1348 = vunpack.c.h.b16 %v1306
        %v1349 = vunpack.c.l.b16 %v1307
        %v1350 = vunpack.c.h.b16 %v1307
        %v1351 = vunpack.c.l.b16 %v1308
        %v1352 = vunpack.c.h.b16 %v1308
        %v1353 = vunpack.c.l.b16 %v1309
        %v1354 = vunpack.c.h.b16 %v1309
        %v1355 = vunpack.c.l.b16 %v1310
        %v1356 = vunpack.c.h.b16 %v1310
        %v1357 = vunpack.c.l.b16 %v1311
        %v1358 = vunpack.c.h.b16 %v1311
        %v1359 = vunpack.c.l.b16 %v1312
        %v1360 = vunpack.c.h.b16 %v1312
        %v1361 = vpack.c.b16 %v1329, %v1329
        %v1362 = vpack.c.b16 %v1330, %v1330
        %v1363 = vpack.c.b16 %v1331, %v1331
        %v1364 = vpack.c.b16 %v1332, %v1332
        %v1365 = vpack.c.b16 %v1333, %v1333
        %v1366 = vpack.c.b16 %v1334, %v1334
        %v1367 = vpack.c.b16 %v1335, %v1335
        %v1368 = vpack.c.b16 %v1336, %v1336
        %v1369 = vpack.c.b16 %v1337, %v1337
        %v1370 = vpack.c.b16 %v1338, %v1338
        %v1371 = vpack.c.b16 %v1339, %v1339
        %v1372 = vpack.c.b16 %v1340, %v1340
        %v1373 = vpack.c.b16 %v1341, %v1341
        %v1374 = vpack.c.b16 %v1342, %v1342
        %v1375 = vpack.c.b16 %v1343, %v1343
        %v1376 = vpack.c.b16 %v1344, %v1344
        %v1377 = vpack.c.b16 %v1345, %v1345
        %v1378 = vpack.c.b16 %v1346, %v1346
        %v1379 = vpack.c.b16 %v1347, %v1347
        %v1380 = vpack.c.b16 %v1348, %v1348
        %v1381 = vpack.c.b16 %v1349, %v1349
        %v1382 = vpack.c.b16 %v1350, %v1350
        %v1383 = vpack.c.b16 %v1351, %v1351
        %v1384 = vpack.c.b16 %v1352, %v1352
        %v1385 = vpack.c.b16 %v1353, %v1353
        %v1386 = vpack.c.b16 %v1354, %v1354
        %v1387 = vpack.c.b16 %v1355, %v1355
        %v1388 = vpack.c.b16 %v1356, %v1356
        %v1389 = vpack.c.b16 %v1357, %v1357
        %v1390 = vpack.c.b16 %v1358, %v1358
        %v1391 = vpack.c.b16 %v1359, %v1359
        %v1392 = vpack.c.b16 %v1360, %v1360
        %1425 = vst [vmem:[%s341] sm:$0xf] %v1361
        %1426 = vst [vmem:[%s341 + $0x4] sm:$0xf] %v1362
        %1427 = vst [vmem:[%s341 + $0x8] sm:$0xf] %v1363
        %1428 = vst [vmem:[%s341 + $0xc] sm:$0xf] %v1364
        %1429 = vst [vmem:[%s341 + $0x10] sm:$0xf] %v1365
        %1430 = vst [vmem:[%s341 + $0x14] sm:$0xf] %v1366
        %1431 = vst [vmem:[%s341 + $0x18] sm:$0xf] %v1367
        %1432 = vst [vmem:[%s341 + $0x1c] sm:$0xf] %v1368
        %1433 = vst [vmem:[%s341 + $0x20] sm:$0xf] %v1369
        %1434 = vst [vmem:[%s341 + $0x24] sm:$0xf] %v1370
        %1435 = vst [vmem:[%s341 + $0x28] sm:$0xf] %v1371
        %1436 = vst [vmem:[%s341 + $0x2c] sm:$0xf] %v1372
        %1437 = vst [vmem:[%s341 + $0x30] sm:$0xf] %v1373
        %1438 = vst [vmem:[%s341 + $0x34] sm:$0xf] %v1374
        %1439 = vst [vmem:[%s341 + $0x38] sm:$0xf] %v1375
        %1440 = vst [vmem:[%s341 + $0x3c] sm:$0xf] %v1376
        %1441 = vst [vmem:[%s341 + $0x40] sm:$0xf] %v1377
        %1442 = vst [vmem:[%s341 + $0x44] sm:$0xf] %v1378
        %1443 = vst [vmem:[%s341 + $0x48] sm:$0xf] %v1379
        %1444 = vst [vmem:[%s341 + $0x4c] sm:$0xf] %v1380
        %1445 = vst [vmem:[%s341 + $0x50] sm:$0xf] %v1381
        %1446 = vst [vmem:[%s341 + $0x54] sm:$0xf] %v1382
        %1447 = vst [vmem:[%s341 + $0x58] sm:$0xf] %v1383
        %1448 = vst [vmem:[%s341 + $0x5c] sm:$0xf] %v1384
        %1449 = vst [vmem:[%s341 + $0x60] sm:$0xf] %v1385
        %1450 = vst [vmem:[%s341 + $0x64] sm:$0xf] %v1386
        %1451 = vst [vmem:[%s341 + $0x68] sm:$0xf] %v1387
        %1452 = vst [vmem:[%s341 + $0x6c] sm:$0xf] %v1388
        %1453 = vst [vmem:[%s341 + $0x70] sm:$0xf] %v1389
        %1454 = vst [vmem:[%s341 + $0x74] sm:$0xf] %v1390
        %1455 = vst [vmem:[%s341 + $0x78] sm:$0xf] %v1391
        %1456 = vst [vmem:[%s341 + $0x7c] sm:$0xf] %v1392
        %s1457 = sand.u32 %s186, 1
        %s1458 = scalar_lea.sflag [#allocation4], %s1457
        %s1459 = sand.u32 %s186, 1
        %s1460 = smul.addr %s1459, 128
        %s1461 = scalar_lea.vmem [#allocation10], %s1460
        // Predicated region
        $region65: #{tpu_custom_call.1} parent=47 // pred_check
          %p1462 = pneg %p196
        $region66: #{tpu_custom_call.1} parent=47 // pred_check_branch
          %1464 = sbr.rel (%p1462) target = $region68
        $region67: #{tpu_custom_call.1} parent=47 // pred_region
          %s1465 = smul.u32 32, %s26
          %s1467 = ssub.s32 2048, 2048
          %1468 = vsyncadd %s1458, %s1467
          %s1469 = smul.addr %s1465, 64
          %s1470 = scalar_lea.hbm %s7, %s1469
          %s1471 = sshll.u32 %s1461, 4
          %s1472 = int_to_ptr.vmem [resolvable:$true] %s1471
          %1477 = dma.vmem_to_hbm [thread:$0]  %s1472, 2048, %s1470, %s1458, 64, 64, 4
        $region68: #{tpu_custom_call.1} parent=47 // pred_fallthru
          _
      $region48: #{tpu_custom_call.1} parent=5 // pred_fallthru
        _
      %p1478 = scmp.le.s32.totalorder 2, %s21
      // Predicated region
      $region69: #{tpu_custom_call.1} parent=5 // pred_check
        %p1479 = pneg %p1478
      $region70: #{tpu_custom_call.1} parent=5 // pred_check_branch
        %1481 = sbr.rel (%p1479) target = $region72
      $region71: #{tpu_custom_call.1} parent=5 // pred_region
        %s1482 = ssub.s32 %s21, 2
        // Predicated region
        $region73: #{tpu_custom_call.1} parent=71 // pred_check
          %p1483 = pneg %p202
        $region74: #{tpu_custom_call.1} parent=71 // pred_check_branch
          %1485 = sbr.rel (%p1483) target = $region76
        $region75: #{tpu_custom_call.1} parent=71 // pred_region
          %s1486 = sand.u32 %s187, 1
          %s1487 = scalar_lea.sflag [#allocation4], %s1486
          %s1488 = sand.u32 %s187, 1
          %s1489 = smul.addr %s1488, 128
          %s1490 = scalar_lea.vmem [#allocation10], %s1489
          %1491 = dma.done %s1487, 2048
        $region76: #{tpu_custom_call.1} parent=71 // pred_fallthru
          _
      $region72: #{tpu_custom_call.1} parent=5 // pred_fallthru
        _
    $region6: #{tpu_custom_call.1} parent=1 // loop_footer
      %s25 = sadd.s32 1, %s21
    $region7: #{tpu_custom_call.1} parent=1 // loop_footer_branch
      %20 = sbr.rel target = $region3
    $region8: #{tpu_custom_call.1} parent=1 // loop_exit
      _
    %1492 = vsyncpa [#allocation3], 1
    %s1493 = scalar_lea.sflag [#allocation3], 1
    %1494 = vsyncpa %s1493, 1
    %1495 = vsyncpa [#allocation6], 1
    %1496 = vsyncpa [#allocation9], 1
    %1497 = vsyncpa [#allocation4], 1
    %s1498 = scalar_lea.sflag [#allocation4], 1
    %1499 = vsyncpa %s1498, 1

</llo_original>
